<compile_context>
chip_gen: v7x
topology: tpu7x:2x2x1
jax: 0.10.0
libtpu: 0.0.40
codegen_flags: <defaults>
</compile_context>

<pallas_src>
import functools

import jax
import jax.numpy as jnp
from jax import lax
from jax.experimental import pallas as pl
from jax.experimental.pallas import tpu as pltpu


def _basic_block_kernel(x_ref, w1_ref, w2_ref, bias_ref, out_ref, mid_ref, *,
                        hp, nb):
    # x_ref   : (M, WC)  bf16 flat H-padded block, M = nb*hp, hp = H+2.
    #           Per-image rows 0 and hp-1 are zeros (conv H padding).
    # w1_ref  : (3, WC, WC) bf16 banded conv1 weights, BN1 scale folded in.
    # w2_ref  : (3, WC, WC) bf16 banded conv2 weights, BN2 scale folded in.
    # bias_ref: (2, WC) f32  rows = [bn1 bias ; bn2 bias], tiled across w.
    # out_ref : (M, WC) f32  (halo rows left unused; wrapper slices them off).
    # mid_ref : (M, WC) bf16 VMEM scratch for the conv1 output (with halo).
    M = out_ref.shape[0]
    WC = out_ref.shape[1]
    Mm = M - 2                      # matmul rows = flat padded positions 1..M-2

    b1 = bias_ref[0:1, :]           # (1, WC) f32
    b2 = bias_ref[1:2, :]

    # ---- conv1 (+ folded bn1 scale) + bias + ReLU: 3 big banded matmuls ----
    acc1 = jnp.zeros((Mm, WC), jnp.float32)
    for kh in range(3):             # static unroll over the 3 row taps
        acc1 = acc1 + jnp.dot(x_ref[kh:kh + Mm, :], w1_ref[kh],
                              preferred_element_type=jnp.float32)
    h1 = jnp.maximum(acc1 + b1, 0.0)

    # Stage intermediate in bf16 (single cast), then restore the per-image zero
    # halo rows that conv2's padding relies on (the fused matmul produced
    # garbage at inter-image halo positions).  Done every step -> megacore safe.
    mid_ref[1:M - 1, :] = h1.astype(jnp.bfloat16)
    zrow = jnp.zeros((1, WC), jnp.bfloat16)
    for b in range(nb):             # 2*nb tiny row stores, negligible
        mid_ref[b * hp:b * hp + 1, :] = zrow
        mid_ref[b * hp + hp - 1:b * hp + hp, :] = zrow

    # ---- conv2 (+ folded bn2 scale) + bias + residual + ReLU ----
    acc2 = jnp.zeros((Mm, WC), jnp.float32)
    for kh in range(3):
        acc2 = acc2 + jnp.dot(mid_ref[kh:kh + Mm, :], w2_ref[kh],
                              preferred_element_type=jnp.float32)

    residual = x_ref[1:M - 1, :].astype(jnp.float32)   # requires Cin == Cmid
    out_ref[1:M - 1, :] = jnp.maximum(acc2 + b2 + residual, 0.0)


def _banded_conv_weights(w_hwio, W):
    """Fold the kw taps + W-direction zero padding of a 3x3 conv into a banded
    matrix.  Returns (3, W*Cin, W*Cout): one (W*Cin, W*Cout) band per kh tap."""
    _, _, Cin, Cout = w_hwio.shape
    kw = jnp.arange(3)[:, None, None]
    wi = jnp.arange(W)[None, :, None]
    wo = jnp.arange(W)[None, None, :]
    # S[kw, wi, wo] = 1 iff input column wi feeds output column wo via tap kw
    S = (wi == wo + kw - 1).astype(w_hwio.dtype)                 # (3, W, W)
    T = jnp.einsum('kab,hkco->hacbo', S, w_hwio)                 # (3, W, Cin, W, Cout)
    return T.reshape(3, W * Cin, W * Cout)


def _auto_images_per_step(n, h, target_rows=256, min_grid_steps=2):
    """Largest divisor of n with nb*(h+2) <= target_rows (MXU row fill), while
    keeping at least `min_grid_steps` grid steps when possible (v7x has 2 TCs
    sharding the 'parallel' batch axis, and >=2 steps keeps DMA overlapped)."""
    divisors = [d for d in range(1, n + 1) if n % d == 0]
    fit = [d for d in divisors if d * (h + 2) <= target_rows] or [1]
    nb = max(fit)
    while nb > 1 and n // nb < min_grid_steps:
        smaller = [d for d in fit if d < nb]
        if not smaller:
            break
        nb = max(smaller)
    return nb


def basic_block_nchw(x_nchw, w1, w2, s1, b1, s2, b2, *, images_per_step=None):
    """PyTorch-compatible entry point: NCHW in, NCHW out (f32)."""
    N, Cin, H, W = x_nchw.shape
    Cmid = w1.shape[-1]
    assert w1.shape == (3, 3, Cin, Cmid) and w2.shape == (3, 3, Cmid, Cmid)
    assert Cin == Cmid, (
        "BasicBlock with stride=1 and no downsample requires inplanes == planes "
        "(residual add would otherwise be ill-shaped).")
    WC = W * Cmid

    if images_per_step is None:
        images_per_step = _auto_images_per_step(N, H)
    Nb = images_per_step
    assert N % Nb == 0
    M = Nb * (H + 2)

    # NCHW -> flat (N*(H+2), W*Cin) bf16, padded in H only (W zero-padding is
    # baked into the banded weights).  Transpose/reshape/pad/cast fuse into the
    # single layout pass XLA must do for NCHW->NHWC anyway.
    x_nhwc = jnp.transpose(x_nchw, (0, 2, 3, 1))
    x_fused = x_nhwc.reshape(N, H, W * Cin)
    x_pad = jnp.pad(x_fused, ((0, 0), (1, 1), (0, 0))).astype(jnp.bfloat16)
    x_flat = x_pad.reshape(N * (H + 2), W * Cin)

    # Banded weights with BN scale folded into the output columns (fold in f32,
    # then cast once to bf16 for the MXU).
    s1t = jnp.tile(s1.reshape(-1), W).astype(jnp.float32)        # (WC,)
    s2t = jnp.tile(s2.reshape(-1), W).astype(jnp.float32)
    B1 = (_banded_conv_weights(w1, W) * s1t[None, None, :]).astype(jnp.bfloat16)
    B2 = (_banded_conv_weights(w2, W) * s2t[None, None, :]).astype(jnp.bfloat16)

    # Pack the two bias vectors into one small (2, WC) f32 input.
    bias = jnp.stack([jnp.tile(b1.reshape(-1), W),
                      jnp.tile(b2.reshape(-1), W)], axis=0).astype(jnp.float32)

    kernel = functools.partial(_basic_block_kernel, hp=H + 2, nb=Nb)

    grid_spec = pltpu.PrefetchScalarGridSpec(
        num_scalar_prefetch=0,
        grid=(N // Nb,),
        in_specs=[
            pl.BlockSpec((M, WC), lambda n: (n, 0)),             # activations
            pl.BlockSpec((3, WC, WC), lambda n: (0, 0, 0)),      # conv1 band
            pl.BlockSpec((3, WC, WC), lambda n: (0, 0, 0)),      # conv2 band
            pl.BlockSpec((2, WC), lambda n: (0, 0)),             # biases
        ],
        out_specs=pl.BlockSpec((M, WC), lambda n: (n, 0)),
        scratch_shapes=[pltpu.VMEM((M, WC), jnp.bfloat16)],
    )

    out_flat = pl.pallas_call(
        kernel,
        out_shape=jax.ShapeDtypeStruct((N * (H + 2), WC), jnp.float32),
        grid_spec=grid_spec,
        compiler_params=pltpu.CompilerParams(
            dimension_semantics=("parallel",)),
    )(x_flat, B1, B2, bias)

    # Drop the H-halo rows, unfuse W*C, and go back to NCHW.
    out_nhwc = out_flat.reshape(N, H + 2, W, Cmid)[:, 1:H + 1]
    return jnp.transpose(out_nhwc, (0, 3, 1, 2))


def _fold_bn(gamma, beta, mean, var, eps=1e-5):
    scale = gamma / jnp.sqrt(var + eps)
    bias = beta - mean * scale
    return scale, bias


def _reference_nhwc(x, w1, w2, s1, b1, s2, b2, *, mixed_precision):
    """Pure-JAX reference.  mixed_precision=True mirrors the kernel exactly
    (BN scales folded into bf16 conv weights, bf16 activations, f32 accum);
    False is the pure-f32 module semantics."""
    dn = ("NHWC", "HWIO", "NHWC")
    if mixed_precision:
        xin = x.astype(jnp.bfloat16)
        cw1 = (w1 * s1.reshape(1, 1, 1, -1)).astype(jnp.bfloat16)
        cw2 = (w2 * s2.reshape(1, 1, 1, -1)).astype(jnp.bfloat16)
        o = lax.conv_general_dilated(xin, cw1, (1, 1), "SAME",
                                     dimension_numbers=dn,
                                     preferred_element_type=jnp.float32)
        o = jnp.maximum(o + b1.reshape(1, 1, 1, -1), 0.0)
        o = lax.conv_general_dilated(o.astype(jnp.bfloat16), cw2, (1, 1), "SAME",
                                     dimension_numbers=dn,
                                     preferred_element_type=jnp.float32)
        o = o + b2.reshape(1, 1, 1, -1)
        return jnp.maximum(o + xin.astype(jnp.float32), 0.0)
    o = lax.conv_general_dilated(x, w1, (1, 1), "SAME", dimension_numbers=dn,
                                 preferred_element_type=jnp.float32)
    o = jnp.maximum(o * s1.reshape(1, 1, 1, -1) + b1.reshape(1, 1, 1, -1), 0.0)
    o = lax.conv_general_dilated(o, w2, (1, 1), "SAME", dimension_numbers=dn,
                                 preferred_element_type=jnp.float32)
    o = o * s2.reshape(1, 1, 1, -1) + b2.reshape(1, 1, 1, -1)
    return jnp.maximum(o + x, 0.0)


if __name__ == "__main__":
    # Small shapes: batch=8, inplanes=planes=8, spatial=16x16 (W*C = 128 lanes),
    # stride=1, downsample=None.  Auto tiling picks images_per_step=4 here
    # (M = 72 matmul rows per step, grid of 2 'parallel' steps).
    N, C, H, W = 8, 8, 16, 16
    planes = C

    key = jax.random.PRNGKey(0)
    k = jax.random.split(key, 8)

    x_nchw = jax.random.normal(k[0], (N, C, H, W), jnp.float32)

    # Conv weights in HWIO layout (kh, kw, Cin, Cout).
    w1 = jax.random.normal(k[1], (3, 3, C, planes), jnp.float32) * 0.1
    w2 = jax.random.normal(k[2], (3, 3, planes, planes), jnp.float32) * 0.1

    # BatchNorm params (inference / running-stats semantics).
    g1 = 1.0 + 0.1 * jax.random.normal(k[3], (planes,), jnp.float32)
    be1 = 0.1 * jax.random.normal(k[4], (planes,), jnp.float32)
    m1 = 0.1 * jax.random.normal(k[5], (planes,), jnp.float32)
    v1 = jnp.abs(jax.random.normal(k[6], (planes,), jnp.float32)) + 0.5
    g2 = jnp.ones((planes,), jnp.float32)
    be2 = jnp.zeros((planes,), jnp.float32)
    m2 = 0.05 * jax.random.normal(k[7], (planes,), jnp.float32)
    v2 = jnp.ones((planes,), jnp.float32)

    s1, b1 = _fold_bn(g1, be1, m1, v1)
    s2, b2 = _fold_bn(g2, be2, m2, v2)

    out = basic_block_nchw(x_nchw, w1, w2, s1, b1, s2, b2)
    out = jax.block_until_ready(out)
    assert out.shape == (N, planes, H, W)

    x_nhwc = jnp.transpose(x_nchw, (0, 2, 3, 1))

    # Tight check against a reference with matching bf16/folded-scale precision.
    ref_mixed = _reference_nhwc(x_nhwc, w1, w2, s1, b1, s2, b2,
                                mixed_precision=True)
    ref_mixed = jnp.transpose(ref_mixed, (0, 3, 1, 2))
    assert jnp.allclose(out, ref_mixed, atol=1e-2, rtol=1e-2), (
        float(jnp.max(jnp.abs(out - ref_mixed))))

    # Loose sanity check against the pure-f32 module semantics.
    ref_f32 = _reference_nhwc(x_nhwc, w1, w2, s1, b1, s2, b2,
                              mixed_precision=False)
    ref_f32 = jnp.transpose(ref_f32, (0, 3, 1, 2))
    assert jnp.allclose(out, ref_f32, atol=1e-1, rtol=1e-1), (
        float(jnp.max(jnp.abs(out - ref_f32))))

    print("KERNEL_OK")
</pallas_src>

<mosaic_0001>
module attributes {stable_mosaic.version = 11 : i64} {
  func.func @_basic_block_kernel(%arg0: i32, %arg1: memref<72x128xbf16, #tpu.memory_space<vmem>>, %arg2: memref<3x128x128xbf16, #tpu.memory_space<vmem>>, %arg3: memref<3x128x128xbf16, #tpu.memory_space<vmem>>, %arg4: memref<2x128xf32, #tpu.memory_space<vmem>>, %arg5: memref<72x128xf32, #tpu.memory_space<vmem>>, %arg6: memref<72x128xbf16, #tpu.memory_space<vmem>>) attributes {dimension_semantics = [#tpu.dimension_semantics<parallel>], iteration_bounds = array<i64: 2>, scalar_prefetch = 0 : i64, scratch_operands = 1 : i64, tpu.core_type = #tpu.core_type<tc>, window_params = [{transform_indices = @transform_0, window_bounds = array<i64: 72, 128>}, {pipeline_mode = #tpu.pipeline_mode<synchronous>, transform_indices = @transform_1, window_bounds = array<i64: 3, 128, 128>}, {pipeline_mode = #tpu.pipeline_mode<synchronous>, transform_indices = @transform_2, window_bounds = array<i64: 3, 128, 128>}, {pipeline_mode = #tpu.pipeline_mode<synchronous>, transform_indices = @transform_3, window_bounds = array<i64: 2, 128>}, {transform_indices = @transform_4, window_bounds = array<i64: 72, 128>}]} {
    %c0 = arith.constant 0 : index
    %c0_0 = arith.constant 0 : index
    %0 = vector.load %arg4[%c0, %c0_0] : memref<2x128xf32, #tpu.memory_space<vmem>>, vector<1x128xf32>
    %c1 = arith.constant 1 : index
    %c0_1 = arith.constant 0 : index
    %1 = vector.load %arg4[%c1, %c0_1] : memref<2x128xf32, #tpu.memory_space<vmem>>, vector<1x128xf32>
    %cst = arith.constant 0.000000e+00 : f32
    %2 = vector.broadcast %cst : f32 to vector<70x128xf32>
    %c0_2 = arith.constant 0 : index
    %c0_3 = arith.constant 0 : index
    %3 = vector.load %arg1[%c0_2, %c0_3] : memref<72x128xbf16, #tpu.memory_space<vmem>>, vector<70x128xbf16>
    %c0_4 = arith.constant 0 : index
    %c0_5 = arith.constant 0 : index
    %c0_6 = arith.constant 0 : index
    %4 = vector.load %arg2[%c0_4, %c0_5, %c0_6] : memref<3x128x128xbf16, #tpu.memory_space<vmem>>, vector<1x128x128xbf16>
    %5 = vector.shape_cast %4 : vector<1x128x128xbf16> to vector<128x128xbf16>
    %cst_7 = arith.constant dense<0.000000e+00> : vector<70x128xf32>
    %6 = tpu.matmul %3, %5, %cst_7 {dimension_numbers = #tpu.dot_dimension_numbers<[1], [0], [0], [1], [0, 0, 1, 1], [], []>} : vector<70x128xbf16>, vector<128x128xbf16>, vector<70x128xf32> -> vector<70x128xf32>
    %7 = arith.addf %2, %6 : vector<70x128xf32>
    %c1_8 = arith.constant 1 : index
    %c0_9 = arith.constant 0 : index
    %8 = vector.load %arg1[%c1_8, %c0_9] : memref<72x128xbf16, #tpu.memory_space<vmem>>, vector<70x128xbf16>
    %c1_10 = arith.constant 1 : index
    %c0_11 = arith.constant 0 : index
    %c0_12 = arith.constant 0 : index
    %9 = vector.load %arg2[%c1_10, %c0_11, %c0_12] : memref<3x128x128xbf16, #tpu.memory_space<vmem>>, vector<1x128x128xbf16>
    %10 = vector.shape_cast %9 : vector<1x128x128xbf16> to vector<128x128xbf16>
    %cst_13 = arith.constant dense<0.000000e+00> : vector<70x128xf32>
    %11 = tpu.matmul %8, %10, %cst_13 {dimension_numbers = #tpu.dot_dimension_numbers<[1], [0], [0], [1], [0, 0, 1, 1], [], []>} : vector<70x128xbf16>, vector<128x128xbf16>, vector<70x128xf32> -> vector<70x128xf32>
    %12 = arith.addf %7, %11 : vector<70x128xf32>
    %c2 = arith.constant 2 : index
    %c0_14 = arith.constant 0 : index
    %13 = vector.load %arg1[%c2, %c0_14] : memref<72x128xbf16, #tpu.memory_space<vmem>>, vector<70x128xbf16>
    %c2_15 = arith.constant 2 : index
    %c0_16 = arith.constant 0 : index
    %c0_17 = arith.constant 0 : index
    %14 = vector.load %arg2[%c2_15, %c0_16, %c0_17] : memref<3x128x128xbf16, #tpu.memory_space<vmem>>, vector<1x128x128xbf16>
    %15 = vector.shape_cast %14 : vector<1x128x128xbf16> to vector<128x128xbf16>
    %cst_18 = arith.constant dense<0.000000e+00> : vector<70x128xf32>
    %16 = tpu.matmul %13, %15, %cst_18 {dimension_numbers = #tpu.dot_dimension_numbers<[1], [0], [0], [1], [0, 0, 1, 1], [], []>} : vector<70x128xbf16>, vector<128x128xbf16>, vector<70x128xf32> -> vector<70x128xf32>
    %17 = arith.addf %12, %16 : vector<70x128xf32>
    %18 = vector.broadcast %0 : vector<1x128xf32> to vector<70x128xf32>
    %19 = arith.addf %17, %18 : vector<70x128xf32>
    %cst_19 = arith.constant 0.000000e+00 : f32
    %20 = vector.broadcast %cst_19 : f32 to vector<70x128xf32>
    %21 = arith.maximumf %19, %20 : vector<70x128xf32>
    %22 = arith.truncf %21 : vector<70x128xf32> to vector<70x128xbf16>
    %c1_20 = arith.constant 1 : index
    %c0_21 = arith.constant 0 : index
    %23 = vector.load %arg6[%c1_20, %c0_21] : memref<72x128xbf16, #tpu.memory_space<vmem>>, vector<70x128xbf16>
    tpu.vector_store %arg6[%c1_20, %c0_21], %22 {strides = array<i32>} : memref<72x128xbf16, #tpu.memory_space<vmem>>, vector<70x128xbf16>,
    %cst_22 = arith.constant 0.000000e+00 : bf16
    %24 = vector.broadcast %cst_22 : bf16 to vector<1x128xbf16>
    %c0_23 = arith.constant 0 : index
    %c0_24 = arith.constant 0 : index
    %25 = vector.load %arg6[%c0_23, %c0_24] : memref<72x128xbf16, #tpu.memory_space<vmem>>, vector<1x128xbf16>
    tpu.vector_store %arg6[%c0_23, %c0_24], %24 {strides = array<i32>} : memref<72x128xbf16, #tpu.memory_space<vmem>>, vector<1x128xbf16>,
    %c17 = arith.constant 17 : index
    %c0_25 = arith.constant 0 : index
    %26 = vector.load %arg6[%c17, %c0_25] : memref<72x128xbf16, #tpu.memory_space<vmem>>, vector<1x128xbf16>
    tpu.vector_store %arg6[%c17, %c0_25], %24 {strides = array<i32>} : memref<72x128xbf16, #tpu.memory_space<vmem>>, vector<1x128xbf16>,
    %c18 = arith.constant 18 : index
    %c0_26 = arith.constant 0 : index
    %27 = vector.load %arg6[%c18, %c0_26] : memref<72x128xbf16, #tpu.memory_space<vmem>>, vector<1x128xbf16>
    tpu.vector_store %arg6[%c18, %c0_26], %24 {strides = array<i32>} : memref<72x128xbf16, #tpu.memory_space<vmem>>, vector<1x128xbf16>,
    %c35 = arith.constant 35 : index
    %c0_27 = arith.constant 0 : index
    %28 = vector.load %arg6[%c35, %c0_27] : memref<72x128xbf16, #tpu.memory_space<vmem>>, vector<1x128xbf16>
    tpu.vector_store %arg6[%c35, %c0_27], %24 {strides = array<i32>} : memref<72x128xbf16, #tpu.memory_space<vmem>>, vector<1x128xbf16>,
    %c36 = arith.constant 36 : index
    %c0_28 = arith.constant 0 : index
    %29 = vector.load %arg6[%c36, %c0_28] : memref<72x128xbf16, #tpu.memory_space<vmem>>, vector<1x128xbf16>
    tpu.vector_store %arg6[%c36, %c0_28], %24 {strides = array<i32>} : memref<72x128xbf16, #tpu.memory_space<vmem>>, vector<1x128xbf16>,
    %c53 = arith.constant 53 : index
    %c0_29 = arith.constant 0 : index
    %30 = vector.load %arg6[%c53, %c0_29] : memref<72x128xbf16, #tpu.memory_space<vmem>>, vector<1x128xbf16>
    tpu.vector_store %arg6[%c53, %c0_29], %24 {strides = array<i32>} : memref<72x128xbf16, #tpu.memory_space<vmem>>, vector<1x128xbf16>,
    %c54 = arith.constant 54 : index
    %c0_30 = arith.constant 0 : index
    %31 = vector.load %arg6[%c54, %c0_30] : memref<72x128xbf16, #tpu.memory_space<vmem>>, vector<1x128xbf16>
    tpu.vector_store %arg6[%c54, %c0_30], %24 {strides = array<i32>} : memref<72x128xbf16, #tpu.memory_space<vmem>>, vector<1x128xbf16>,
    %c71 = arith.constant 71 : index
    %c0_31 = arith.constant 0 : index
    %32 = vector.load %arg6[%c71, %c0_31] : memref<72x128xbf16, #tpu.memory_space<vmem>>, vector<1x128xbf16>
    tpu.vector_store %arg6[%c71, %c0_31], %24 {strides = array<i32>} : memref<72x128xbf16, #tpu.memory_space<vmem>>, vector<1x128xbf16>,
    %cst_32 = arith.constant 0.000000e+00 : f32
    %33 = vector.broadcast %cst_32 : f32 to vector<70x128xf32>
    %c0_33 = arith.constant 0 : index
    %c0_34 = arith.constant 0 : index
    %34 = vector.load %arg6[%c0_33, %c0_34] : memref<72x128xbf16, #tpu.memory_space<vmem>>, vector<70x128xbf16>
    %c0_35 = arith.constant 0 : index
    %c0_36 = arith.constant 0 : index
    %c0_37 = arith.constant 0 : index
    %35 = vector.load %arg3[%c0_35, %c0_36, %c0_37] : memref<3x128x128xbf16, #tpu.memory_space<vmem>>, vector<1x128x128xbf16>
    %36 = vector.shape_cast %35 : vector<1x128x128xbf16> to vector<128x128xbf16>
    %cst_38 = arith.constant dense<0.000000e+00> : vector<70x128xf32>
    %37 = tpu.matmul %34, %36, %cst_38 {dimension_numbers = #tpu.dot_dimension_numbers<[1], [0], [0], [1], [0, 0, 1, 1], [], []>} : vector<70x128xbf16>, vector<128x128xbf16>, vector<70x128xf32> -> vector<70x128xf32>
    %38 = arith.addf %33, %37 : vector<70x128xf32>
    %c1_39 = arith.constant 1 : index
    %c0_40 = arith.constant 0 : index
    %39 = vector.load %arg6[%c1_39, %c0_40] : memref<72x128xbf16, #tpu.memory_space<vmem>>, vector<70x128xbf16>
    %c1_41 = arith.constant 1 : index
    %c0_42 = arith.constant 0 : index
    %c0_43 = arith.constant 0 : index
    %40 = vector.load %arg3[%c1_41, %c0_42, %c0_43] : memref<3x128x128xbf16, #tpu.memory_space<vmem>>, vector<1x128x128xbf16>
    %41 = vector.shape_cast %40 : vector<1x128x128xbf16> to vector<128x128xbf16>
    %cst_44 = arith.constant dense<0.000000e+00> : vector<70x128xf32>
    %42 = tpu.matmul %39, %41, %cst_44 {dimension_numbers = #tpu.dot_dimension_numbers<[1], [0], [0], [1], [0, 0, 1, 1], [], []>} : vector<70x128xbf16>, vector<128x128xbf16>, vector<70x128xf32> -> vector<70x128xf32>
    %43 = arith.addf %38, %42 : vector<70x128xf32>
    %c2_45 = arith.constant 2 : index
    %c0_46 = arith.constant 0 : index
    %44 = vector.load %arg6[%c2_45, %c0_46] : memref<72x128xbf16, #tpu.memory_space<vmem>>, vector<70x128xbf16>
    %c2_47 = arith.constant 2 : index
    %c0_48 = arith.constant 0 : index
    %c0_49 = arith.constant 0 : index
    %45 = vector.load %arg3[%c2_47, %c0_48, %c0_49] : memref<3x128x128xbf16, #tpu.memory_space<vmem>>, vector<1x128x128xbf16>
    %46 = vector.shape_cast %45 : vector<1x128x128xbf16> to vector<128x128xbf16>
    %cst_50 = arith.constant dense<0.000000e+00> : vector<70x128xf32>
    %47 = tpu.matmul %44, %46, %cst_50 {dimension_numbers = #tpu.dot_dimension_numbers<[1], [0], [0], [1], [0, 0, 1, 1], [], []>} : vector<70x128xbf16>, vector<128x128xbf16>, vector<70x128xf32> -> vector<70x128xf32>
    %48 = arith.addf %43, %47 : vector<70x128xf32>
    %c1_51 = arith.constant 1 : index
    %c0_52 = arith.constant 0 : index
    %49 = vector.load %arg1[%c1_51, %c0_52] : memref<72x128xbf16, #tpu.memory_space<vmem>>, vector<70x128xbf16>
    %50 = arith.extf %49 : vector<70x128xbf16> to vector<70x128xf32>
    %51 = vector.broadcast %1 : vector<1x128xf32> to vector<70x128xf32>
    %52 = arith.addf %48, %51 : vector<70x128xf32>
    %53 = arith.addf %52, %50 : vector<70x128xf32>
    %cst_53 = arith.constant 0.000000e+00 : f32
    %54 = vector.broadcast %cst_53 : f32 to vector<70x128xf32>
    %55 = arith.maximumf %53, %54 : vector<70x128xf32>
    %c1_54 = arith.constant 1 : index
    %c0_55 = arith.constant 0 : index
    %56 = vector.load %arg5[%c1_54, %c0_55] : memref<72x128xf32, #tpu.memory_space<vmem>>, vector<70x128xf32>
    tpu.vector_store %arg5[%c1_54, %c0_55], %55 {strides = array<i32>} : memref<72x128xf32, #tpu.memory_space<vmem>>, vector<70x128xf32>,
    return
  }
  func.func @transform_0(%arg0: i32) -> (i32, i32) {
    %c0_i32 = arith.constant 0 : i32
    %c0_i32_0 = arith.constant 0 : i32
    return %arg0, %c0_i32 : i32, i32
  }
  func.func @transform_1(%arg0: i32) -> (i32, i32, i32) {
    %c0_i32 = arith.constant 0 : i32
    %c0_i32_0 = arith.constant 0 : i32
    %c0_i32_1 = arith.constant 0 : i32
    %c0_i32_2 = arith.constant 0 : i32
    return %c0_i32, %c0_i32_0, %c0_i32_1 : i32, i32, i32
  }
  func.func @transform_2(%arg0: i32) -> (i32, i32, i32) {
    %c0_i32 = arith.constant 0 : i32
    %c0_i32_0 = arith.constant 0 : i32
    %c0_i32_1 = arith.constant 0 : i32
    %c0_i32_2 = arith.constant 0 : i32
    return %c0_i32, %c0_i32_0, %c0_i32_1 : i32, i32, i32
  }
  func.func @transform_3(%arg0: i32) -> (i32, i32) {
    %c0_i32 = arith.constant 0 : i32
    %c0_i32_0 = arith.constant 0 : i32
    %c0_i32_1 = arith.constant 0 : i32
    return %c0_i32, %c0_i32_0 : i32, i32
  }
  func.func @transform_4(%arg0: i32) -> (i32, i32) {
    %c0_i32 = arith.constant 0 : i32
    %c0_i32_0 = arith.constant 0 : i32
    return %arg0, %c0_i32 : i32, i32
  }
}

</mosaic_0001>

<llo_original>
// kernel: tpu_custom_call.1
$region0: #{tpu_custom_call.1}
  #allocation0 [shape = 'u32[]', space=smem, size = 0x4, offset = 0x4, fixed_abs, tag = 'smem constant byte address 0x4 - core index']
  #allocation1 [shape = 'u32[144,128]{1,0:T(1,128)}', space=vmem, size = 0x12000, scoped, tag = 'internal scratch']
  #allocation2 [shape = 'bf16[72,128]{1,0:T(8,128)(2,1)}', space=vmem, size = 0x4800, scoped, tag = 'scratch operand']
  %s0 = inlined_call_operand.hbm [shape: bf16[144,128], index: 0, kind: input, shape index: {}]
  %s1 = inlined_call_operand.hbm [shape: bf16[3,128,128], index: 1, kind: input, shape index: {}]
  %s2 = inlined_call_operand.hbm [shape: bf16[3,128,128], index: 2, kind: input, shape index: {}]
  %s3 = inlined_call_operand.vmem [shape: f32[2,128], index: 3, kind: input, shape index: {}]
  %s4 = inlined_call_operand.hbm [shape: f32[144,128], index: 4, kind: output, shape index: {}]
  %s5 = sld [smem:[#allocation0]]
  $region61: #{tpu_custom_call.1} parent=0
    _
  %s7 = ssub.s32 1, %s5
  %s8 = scalar_select 0, %s7, %s5
  $region1: #{tpu_custom_call.1} parent=0
    #allocation3 [shape = 'u8[36864]{0}', space=vmem, size = 0x9000, scoped, tag = 'input window, operand 0']
    #allocation4 [shape = 's32[2]{0}', space=sflag, size = 0x8, scoped, tag = 'scoped memory for tpu_custom_call.1']
    #allocation5 [shape = 's32[2]{0}', space=sflag, size = 0x8, scoped, tag = 'scoped memory for tpu_custom_call.1']
    #allocation6 [shape = 'u8[98304]{0}', space=vmem, size = 0x18000, scoped, tag = 'input window, operand 1, single buffered']
    #allocation7 [shape = 's32[1]{0}', space=sflag, size = 0x4, scoped, tag = 'scoped memory for tpu_custom_call.1']
    #allocation8 [shape = 'u8[98304]{0}', space=vmem, size = 0x18000, scoped, tag = 'input window, operand 2, single buffered']
    #allocation9 [shape = 'u8[73728]{0}', space=vmem, size = 0x12000, scoped, tag = 'output window, operand 0']
    %9 = vsyncpa [#allocation4], 0
    %s10 = scalar_lea.sflag [#allocation4], 1
    %11 = vsyncpa %s10, 0
    %12 = vsyncpa [#allocation7], 0
    %13 = vsyncpa [#allocation5], 0
    %s14 = scalar_lea.sflag [#allocation5], 1
    %15 = vsyncpa %s14, 0
    loop: start=0, step=1, limit=4
    $region2: #{tpu_custom_call.1} parent=1 // loop_pre_header
      _
    $region3: #{tpu_custom_call.1} parent=1 // loop_header
      %s17 = sphi 0, %s21
      %p18 = scmp.ge.s32.totalorder %s17, 4
      %s27 = sphi 0, %s29
      %s30 = sphi 0, %s27
      %s31 = sphi 0, %s30
      %s47 = sphi 0, %s31
      %s51 = sphi 0, %s51
      %s53 = sphi 0, %s51
      %s54 = sphi 0, %s53
      %s68 = sphi 0, %s54
      %s72 = sphi 0, %s72
      %s74 = sphi 0, %s72
      %s75 = sphi 0, %s74
      %s89 = sphi 0, %s75
      %s93 = sphi 0, %s93
      %s95 = sphi 0, %s93
      %s96 = sphi 0, %s95
      %s110 = sphi 0, %s96
      %s116 = sphi 0, %s118
      %s119 = sphi 0, %s116
      %s120 = sphi 0, %s119
      %s136 = sphi 0, %s120
    $region4: #{tpu_custom_call.1} parent=1 // loop_header_branch
      %20 = sbr.rel (%p18) target = $region8
    $region5: #{tpu_custom_call.1} parent=1 // loop_body
      %s22 = ssub.s32 %s17, 1
      %s23 = ssub.s32 %s17, 2
      %s24 = sadd.s32 %s17, 1
      %s25 = ssub.s32 %s17, %s24
      %p26 = scmp.eq.s32.totalorder %s25, 0
      %s28 = sadd.s32 %s27, 1
      %s29 = scalar_select %p26, %s27, %s28
      %p32 = pneg %p26
      %p33 = scmp.eq.s32.totalorder %s17, 1
      %p34 = por %p32, %p33
      %p35 = scmp.ne.s32.totalorder %s27, %s30
      %p36 = scmp.eq.s32.totalorder %s17, 0
      %p37 = por %p35, %p36
      %p38 = scmp.ne.s32.totalorder %s27, %s30
      %p39 = scmp.eq.s32.totalorder %s22, 1
      %p40 = por %p38, %p39
      %p41 = scmp.ne.s32.totalorder %s30, %s31
      %p42 = scmp.eq.s32.totalorder %s22, 0
      %p43 = por %p41, %p42
      %p44 = scmp.ne.s32.totalorder %s30, %s31
      %p45 = scmp.eq.s32.totalorder %s23, 1
      %p46 = por %p44, %p45
      %p48 = scmp.ne.s32.totalorder %s31, %s47
      %p49 = scmp.eq.s32.totalorder %s23, 0
      %p50 = por %p48, %p49
      %s52 = sadd.s32 %s51, 1
      %p55 = scmp.eq.s32.totalorder %s17, 1
      %p56 = scmp.ne.s32.totalorder %s51, %s53
      %p57 = scmp.eq.s32.totalorder %s17, 0
      %p58 = por %p56, %p57
      %p59 = scmp.ne.s32.totalorder %s51, %s53
      %p60 = scmp.eq.s32.totalorder %s22, 1
      %p61 = por %p59, %p60
      %p62 = scmp.ne.s32.totalorder %s53, %s54
      %p63 = scmp.eq.s32.totalorder %s22, 0
      %p64 = por %p62, %p63
      %p65 = scmp.ne.s32.totalorder %s53, %s54
      %p66 = scmp.eq.s32.totalorder %s23, 1
      %p67 = por %p65, %p66
      %p69 = scmp.ne.s32.totalorder %s54, %s68
      %p70 = scmp.eq.s32.totalorder %s23, 0
      %p71 = por %p69, %p70
      %s73 = sadd.s32 %s72, 1
      %p76 = scmp.eq.s32.totalorder %s17, 1
      %p77 = scmp.ne.s32.totalorder %s72, %s74
      %p78 = scmp.eq.s32.totalorder %s17, 0
      %p79 = por %p77, %p78
      %p80 = scmp.ne.s32.totalorder %s72, %s74
      %p81 = scmp.eq.s32.totalorder %s22, 1
      %p82 = por %p80, %p81
      %p83 = scmp.ne.s32.totalorder %s74, %s75
      %p84 = scmp.eq.s32.totalorder %s22, 0
      %p85 = por %p83, %p84
      %p86 = scmp.ne.s32.totalorder %s74, %s75
      %p87 = scmp.eq.s32.totalorder %s23, 1
      %p88 = por %p86, %p87
      %p90 = scmp.ne.s32.totalorder %s75, %s89
      %p91 = scmp.eq.s32.totalorder %s23, 0
      %p92 = por %p90, %p91
      %s94 = sadd.s32 %s93, 1
      %p97 = scmp.eq.s32.totalorder %s17, 1
      %p98 = scmp.ne.s32.totalorder %s93, %s95
      %p99 = scmp.eq.s32.totalorder %s17, 0
      %p100 = por %p98, %p99
      %p101 = scmp.ne.s32.totalorder %s93, %s95
      %p102 = scmp.eq.s32.totalorder %s22, 1
      %p103 = por %p101, %p102
      %p104 = scmp.ne.s32.totalorder %s95, %s96
      %p105 = scmp.eq.s32.totalorder %s22, 0
      %p106 = por %p104, %p105
      %p107 = scmp.ne.s32.totalorder %s95, %s96
      %p108 = scmp.eq.s32.totalorder %s23, 1
      %p109 = por %p107, %p108
      %p111 = scmp.ne.s32.totalorder %s96, %s110
      %p112 = scmp.eq.s32.totalorder %s23, 0
      %p113 = por %p111, %p112
      %s114 = ssub.s32 %s17, %s24
      %p115 = scmp.eq.s32.totalorder %s114, 0
      %s117 = sadd.s32 %s116, 1
      %s118 = scalar_select %p115, %s116, %s117
      %p121 = pneg %p115
      %p122 = scmp.eq.s32.totalorder %s17, 1
      %p123 = por %p121, %p122
      %p124 = scmp.ne.s32.totalorder %s116, %s119
      %p125 = scmp.eq.s32.totalorder %s17, 0
      %p126 = por %p124, %p125
      %p127 = scmp.ne.s32.totalorder %s116, %s119
      %p128 = scmp.eq.s32.totalorder %s22, 1
      %p129 = por %p127, %p128
      %p130 = scmp.ne.s32.totalorder %s119, %s120
      %p131 = scmp.eq.s32.totalorder %s22, 0
      %p132 = por %p130, %p131
      %p133 = scmp.ne.s32.totalorder %s119, %s120
      %p134 = scmp.eq.s32.totalorder %s23, 1
      %p135 = por %p133, %p134
      %p137 = scmp.ne.s32.totalorder %s120, %s136
      %p138 = scmp.eq.s32.totalorder %s23, 0
      %p139 = por %p137, %p138
      %p140 = scmp.le.s32.totalorder 1, %s17
      %p141 = scmp.lt.s32.totalorder %s17, 3
      %p142 = pnand %p140, %p141
      %p143 = pneg %p142
      // Predicated region
      $region9: #{tpu_custom_call.1} parent=5 // pred_check
        _
      $region10: #{tpu_custom_call.1} parent=5 // pred_check_branch
        %145 = sbr.rel (%p142) target = $region12
      $region11: #{tpu_custom_call.1} parent=5 // pred_region
        %s146 = ssub.s32 %s17, 1
        // Predicated region
        $region13: #{tpu_custom_call.1} parent=11 // pred_check
          %p147 = pneg %p64
        $region14: #{tpu_custom_call.1} parent=11 // pred_check_branch
          %149 = sbr.rel (%p147) target = $region16
        $region15: #{tpu_custom_call.1} parent=11 // pred_region
          %s151 = ssub.s32 3072, 3072
          %152 = vsyncadd [#allocation7], %s151
          %s153 = sshll.u32 [#allocation6], 4
          %s154 = int_to_ptr.vmem [resolvable:$true] %s153
          %159 = dma.hbm_to_vmem [thread:$0]  %s1, 3072, %s154, [#allocation7], 64, 64, 4
        $region16: #{tpu_custom_call.1} parent=11 // pred_fallthru
          _
        // Predicated region
        $region17: #{tpu_custom_call.1} parent=11 // pred_check
          %p160 = pneg %p85
        $region18: #{tpu_custom_call.1} parent=11 // pred_check_branch
          %162 = sbr.rel (%p160) target = $region20
        $region19: #{tpu_custom_call.1} parent=11 // pred_region
          %s164 = ssub.s32 3072, 3072
          %165 = vsyncadd [#allocation7], %s164
          %s166 = sshll.u32 [#allocation8], 4
          %s167 = int_to_ptr.vmem [resolvable:$true] %s166
          %172 = dma.hbm_to_vmem [thread:$0]  %s2, 3072, %s167, [#allocation7], 64, 64, 4
        $region20: #{tpu_custom_call.1} parent=11 // pred_fallthru
          _
        // Predicated region
        $region21: #{tpu_custom_call.1} parent=11 // pred_check
          %p173 = pneg %p106
        $region22: #{tpu_custom_call.1} parent=11 // pred_check_branch
          %175 = sbr.rel (%p173) target = $region24
        $region23: #{tpu_custom_call.1} parent=11 // pred_region
          _
        $region24: #{tpu_custom_call.1} parent=11 // pred_fallthru
          _
      $region12: #{tpu_custom_call.1} parent=5 // pred_fallthru
        _
      %p176 = scmp.lt.s32.totalorder %s17, 2
      // Predicated region
      $region25: #{tpu_custom_call.1} parent=5 // pred_check
        %p177 = pneg %p176
      $region26: #{tpu_custom_call.1} parent=5 // pred_check_branch
        %179 = sbr.rel (%p177) target = $region28
      $region27: #{tpu_custom_call.1} parent=5 // pred_region
        // Predicated region
        $region29: #{tpu_custom_call.1} parent=27 // pred_check
          %p180 = pneg %p37
        $region30: #{tpu_custom_call.1} parent=27 // pred_check_branch
          %182 = sbr.rel (%p180) target = $region32
        $region31: #{tpu_custom_call.1} parent=27 // pred_region
          %s183 = sand.u32 %s27, 1
          %s184 = scalar_lea.sflag [#allocation4], %s183
          %s185 = sand.u32 %s27, 1
          %s186 = smul.addr %s185, 36
          %s187 = scalar_lea.vmem [#allocation3], %s186
          %s188 = smul.u32 9, %s17
          %s190 = ssub.s32 576, 576
          %191 = vsyncadd %s184, %s190
          %s192 = smul.addr %s188, 64
          %s193 = scalar_lea.hbm %s0, %s192
          %s194 = sshll.u32 %s187, 4
          %s195 = int_to_ptr.vmem [resolvable:$true] %s194
          %200 = dma.hbm_to_vmem [thread:$0]  %s193, 576, %s195, %s184, 64, 64, 4
        $region32: #{tpu_custom_call.1} parent=27 // pred_fallthru
          _
      $region28: #{tpu_custom_call.1} parent=5 // pred_fallthru
        _
      %p201 = scmp.le.s32.totalorder 1, %s17
      %p202 = scmp.lt.s32.totalorder %s17, 3
      %p203 = pnand %p201, %p202
      %p204 = pneg %p203
      // Predicated region
      $region33: #{tpu_custom_call.1} parent=5 // pred_check
        _
      $region34: #{tpu_custom_call.1} parent=5 // pred_check_branch
        %206 = sbr.rel (%p203) target = $region36
      $region35: #{tpu_custom_call.1} parent=5 // pred_region
        %s207 = ssub.s32 %s17, 1
        %s208 = sand.u32 %s30, 1
        %s209 = scalar_lea.sflag [#allocation4], %s208
        %s210 = sand.u32 %s30, 1
        %s211 = smul.addr %s210, 36
        %s212 = scalar_lea.vmem [#allocation3], %s211
        // Predicated region
        $region37: #{tpu_custom_call.1} parent=35 // pred_check
          %p213 = pneg %p43
        $region38: #{tpu_custom_call.1} parent=35 // pred_check_branch
          %215 = sbr.rel (%p213) target = $region40
        $region39: #{tpu_custom_call.1} parent=35 // pred_region
          %216 = dma.done %s209, 576
        $region40: #{tpu_custom_call.1} parent=35 // pred_fallthru
          _
        // Predicated region
        $region41: #{tpu_custom_call.1} parent=35 // pred_check
          %p217 = pneg %p64
        $region42: #{tpu_custom_call.1} parent=35 // pred_check_branch
          %219 = sbr.rel (%p217) target = $region44
        $region43: #{tpu_custom_call.1} parent=35 // pred_region
          %220 = dma.done [#allocation7], 3072
        $region44: #{tpu_custom_call.1} parent=35 // pred_fallthru
          _
        // Predicated region
        $region45: #{tpu_custom_call.1} parent=35 // pred_check
          %p221 = pneg %p85
        $region46: #{tpu_custom_call.1} parent=35 // pred_check_branch
          %223 = sbr.rel (%p221) target = $region48
        $region47: #{tpu_custom_call.1} parent=35 // pred_region
          %224 = dma.done [#allocation7], 3072
        $region48: #{tpu_custom_call.1} parent=35 // pred_fallthru
          _
        %s225 = sand.u32 %s30, 1
        %s226 = scalar_lea.sflag [#allocation4], %s225
        %s227 = sand.u32 %s30, 1
        %s228 = smul.addr %s227, 36
        %s229 = scalar_lea.vmem [#allocation3], %s228
        %p230 = pneg %p43
        %p231 = pneg %p40
        %p232 = pneg %p64
        %p233 = pneg %p61
        %p234 = pneg %p85
        %p235 = pneg %p82
        %p236 = pneg %p106
        %p237 = pneg %p103
        %p238 = pneg %p132
        %p239 = pneg %p129
        %s240 = sand.u32 %s119, 1
        %s241 = scalar_lea.sflag [#allocation5], %s240
        %s242 = sand.u32 %s119, 1
        %s243 = smul.addr %s242, 72
        %s244 = scalar_lea.vmem [#allocation9], %s243
        %s245 = smul.u32 9, %s22
        %s246 = smul.u32 9, %s22
        %v248 = vld [vmem:[%s3] sm:$0x1]
        %v249 = vld [vmem:[%s3 + $0x1] sm:$0x1]
        %v250 = vld [vmem:[%s212] sm:$0xf]
        %v251 = vld [vmem:[%s212 + $0x4] sm:$0xf]
        %v252 = vld [vmem:[%s212 + $0x8] sm:$0xf]
        %v253 = vld [vmem:[%s212 + $0xc] sm:$0xf]
        %v254 = vld [vmem:[%s212 + $0x10] sm:$0xf]
        %v255 = vld [vmem:[%s212 + $0x14] sm:$0xf]
        %v256 = vld [vmem:[%s212 + $0x18] sm:$0xf]
        %v257 = vld [vmem:[%s212 + $0x1c] sm:$0xf]
        %v258 = vld [vmem:[%s212 + $0x20] sm:$0x7]
        %v259 = vld [vmem:[#allocation6] sm:$0xf]
        %v260 = vld [vmem:[#allocation6 + $0x4] sm:$0xf]
        %v261 = vld [vmem:[#allocation6 + $0x8] sm:$0xf]
        %v262 = vld [vmem:[#allocation6 + $0xc] sm:$0xf]
        %v263 = vld [vmem:[#allocation6 + $0x10] sm:$0xf]
        %v264 = vld [vmem:[#allocation6 + $0x14] sm:$0xf]
        %v265 = vld [vmem:[#allocation6 + $0x18] sm:$0xf]
        %v266 = vld [vmem:[#allocation6 + $0x1c] sm:$0xf]
        %v267 = vld [vmem:[#allocation6 + $0x20] sm:$0xf]
        %v268 = vld [vmem:[#allocation6 + $0x24] sm:$0xf]
        %v269 = vld [vmem:[#allocation6 + $0x28] sm:$0xf]
        %v270 = vld [vmem:[#allocation6 + $0x2c] sm:$0xf]
        %v271 = vld [vmem:[#allocation6 + $0x30] sm:$0xf]
        %v272 = vld [vmem:[#allocation6 + $0x34] sm:$0xf]
        %v273 = vld [vmem:[#allocation6 + $0x38] sm:$0xf]
        %v274 = vld [vmem:[#allocation6 + $0x3c] sm:$0xf]
        %v275 = vld [vmem:[%s212 + $0x20] sm:$0xf]
        %s276 = scalar_lea.vmem [#allocation6], 64
        %v277 = vld [vmem:[%s276] sm:$0xf]
        %v278 = vld [vmem:[%s276 + $0x4] sm:$0xf]
        %v279 = vld [vmem:[%s276 + $0x8] sm:$0xf]
        %v280 = vld [vmem:[%s276 + $0xc] sm:$0xf]
        %v281 = vld [vmem:[%s276 + $0x10] sm:$0xf]
        %v282 = vld [vmem:[%s276 + $0x14] sm:$0xf]
        %v283 = vld [vmem:[%s276 + $0x18] sm:$0xf]
        %v284 = vld [vmem:[%s276 + $0x1c] sm:$0xf]
        %v285 = vld [vmem:[%s276 + $0x20] sm:$0xf]
        %v286 = vld [vmem:[%s276 + $0x24] sm:$0xf]
        %v287 = vld [vmem:[%s276 + $0x28] sm:$0xf]
        %v288 = vld [vmem:[%s276 + $0x2c] sm:$0xf]
        %v289 = vld [vmem:[%s276 + $0x30] sm:$0xf]
        %v290 = vld [vmem:[%s276 + $0x34] sm:$0xf]
        %v291 = vld [vmem:[%s276 + $0x38] sm:$0xf]
        %v292 = vld [vmem:[%s276 + $0x3c] sm:$0xf]
        %v302 = vunpack.c.l.b16 %v250
        %v303 = vunpack.c.l.b16 %v251
        %v304 = vunpack.c.l.b16 %v252
        %v305 = vunpack.c.l.b16 %v253
        %v306 = vunpack.c.l.b16 %v254
        %v307 = vunpack.c.l.b16 %v255
        %v308 = vunpack.c.l.b16 %v256
        %v309 = vunpack.c.l.b16 %v257
        %v310 = vunpack.c.l.b16 %v275
        %v311 = vpack.c.b16 %v303, %v302
        %v312 = vpack.c.b16 %v305, %v304
        %v313 = vpack.c.b16 %v307, %v306
        %v314 = vpack.c.b16 %v309, %v308
        %v315 = vpack.c.b16 %v310, %v310
        %vm316 = vsmask.f32 7424
        %v318 = vshrl.u32 %v311, 16
        %v320 = vshll.u32 %v311, 16
        %v322 = vrot.slane %v320, 1
        %v323 = vor.u32 %v318, %v322
        %v325 = vshll.u32 %v312, 16
        %v327 = vrot.slane %v325, 1
        %v328 = vsel %vm316, %v323, %v327
        %v329 = vshrl.u32 %v312, 16
        %v331 = vor.u32 %v329, %v327
        %v333 = vshll.u32 %v313, 16
        %v335 = vrot.slane %v333, 1
        %v336 = vsel %vm316, %v331, %v335
        %v337 = vshrl.u32 %v313, 16
        %v339 = vor.u32 %v337, %v335
        %v341 = vshll.u32 %v314, 16
        %v343 = vrot.slane %v341, 1
        %v344 = vsel %vm316, %v339, %v343
        %v345 = vshrl.u32 %v314, 16
        %v347 = vor.u32 %v345, %v343
        %v349 = vshll.u32 %v315, 16
        %v351 = vrot.slane %v349, 1
        %v352 = vsel %vm316, %v347, %v351
        %v353 = vshrl.u32 %v315, 16
        %v355 = vor.u32 %v353, %v351
        %v377 = vunpack.c.l.b16 %v277
        %v378 = vunpack.c.l.b16 %v278
        %v379 = vunpack.c.l.b16 %v279
        %v380 = vunpack.c.l.b16 %v280
        %v381 = vunpack.c.l.b16 %v281
        %v382 = vunpack.c.l.b16 %v282
        %v383 = vunpack.c.l.b16 %v283
        %v384 = vunpack.c.l.b16 %v284
        %v385 = vunpack.c.l.b16 %v285
        %v386 = vunpack.c.l.b16 %v286
        %v387 = vunpack.c.l.b16 %v287
        %v388 = vunpack.c.l.b16 %v288
        %v389 = vunpack.c.l.b16 %v289
        %v390 = vunpack.c.l.b16 %v290
        %v391 = vunpack.c.l.b16 %v291
        %v392 = vunpack.c.l.b16 %v292
        %v393 = vpack.c.b16 %v378, %v377
        %v394 = vpack.c.b16 %v380, %v379
        %v395 = vpack.c.b16 %v382, %v381
        %v396 = vpack.c.b16 %v384, %v383
        %v397 = vpack.c.b16 %v386, %v385
        %v398 = vpack.c.b16 %v388, %v387
        %v399 = vpack.c.b16 %v390, %v389
        %v400 = vpack.c.b16 %v392, %v391
        %409 = vmatprep.subr.bf16.mxu0 0
        %410 = vmatpush1.bf16.msra.mxu0 %v393
        %411 = vmatprep.subr.bf16.mxu0 0
        %412 = vmatpush1.bf16.msra.mxu0 %v394
        %413 = vmatprep.subr.bf16.mxu0 0
        %414 = vmatpush1.bf16.msra.mxu0 %v395
        %415 = vmatprep.subr.bf16.mxu0 0
        %416 = vmatpush1.bf16.msra.mxu0 %v396
        %417 = vmatprep.subr.bf16.mxu0 0
        %418 = vmatpush1.bf16.msra.mxu0 %v397
        %419 = vmatprep.subr.bf16.mxu0 0
        %420 = vmatpush1.bf16.msra.mxu0 %v398
        %421 = vmatprep.subr.bf16.mxu0 0
        %422 = vmatpush1.bf16.msra.mxu0 %v399
        %423 = vmatprep.subr.bf16.mxu0 0
        %424 = vmatpush1.bf16.msra.mxu0 %v400
        %425 = vmatprep.subr.bf16.mxu0 0
        %426 = vmatpush1.bf16.msra.mxu0 0
        %427 = vmatprep.subr.bf16.mxu0 0
        %428 = vmatpush1.bf16.msra.mxu0 0
        %429 = vmatprep.subr.bf16.mxu0 0
        %430 = vmatpush1.bf16.msra.mxu0 0
        %431 = vmatprep.subr.bf16.mxu0 0
        %432 = vmatpush1.bf16.msra.mxu0 0
        %433 = vmatprep.subr.bf16.mxu0 0
        %434 = vmatpush1.bf16.msra.mxu0 0
        %435 = vmatprep.subr.bf16.mxu0 0
        %436 = vmatpush1.bf16.msra.mxu0 0
        %437 = vmatprep.subr.bf16.mxu0 0
        %438 = vmatpush1.bf16.msra.mxu0 0
        %439 = vmatprep.subr.bf16.mxu0 0
        %440 = vmatpush1.bf16.msra.mxu0 0
        %441 = vmatprep.mubr.bf16.mxu0 0
        %442 = vmatmul.mubr.bf16.gmra.mrb[0].mxu0 %v328
        %v443 = vpop.f32.mrb[0].mxu0
        %v444 = vadd.f32 0.0, %v443
        %v445 = vpop.f32.mrb[0].mxu0
        %v446 = vpop.f32.mrb[0].mxu0
        %v447 = vadd.f32 0.0, %v446
        %v448 = vpop.f32.mrb[0].mxu0
        %449 = vmatprep.mubr.bf16.mxu0 0
        %450 = vmatmul.mubr.bf16.gmra.mrb[0].mxu0 %v336
        %v451 = vpop.f32.mrb[0].mxu0
        %v452 = vadd.f32 0.0, %v451
        %v453 = vpop.f32.mrb[0].mxu0
        %v454 = vpop.f32.mrb[0].mxu0
        %v455 = vadd.f32 0.0, %v454
        %v456 = vpop.f32.mrb[0].mxu0
        %457 = vmatprep.mubr.bf16.mxu0 0
        %458 = vmatmul.mubr.bf16.gmra.mrb[0].mxu0 %v344
        %v459 = vpop.f32.mrb[0].mxu0
        %v460 = vadd.f32 0.0, %v459
        %v461 = vpop.f32.mrb[0].mxu0
        %v462 = vpop.f32.mrb[0].mxu0
        %v463 = vadd.f32 0.0, %v462
        %v464 = vpop.f32.mrb[0].mxu0
        %465 = vmatprep.mubr.bf16.mxu0 0
        %466 = vmatmul.mubr.bf16.gmra.mrb[0].mxu0 %v352
        %v467 = vpop.f32.mrb[0].mxu0
        %v468 = vadd.f32 0.0, %v467
        %v469 = vpop.f32.mrb[0].mxu0
        %v470 = vpop.f32.mrb[0].mxu0
        %v471 = vadd.f32 0.0, %v470
        %v472 = vpop.f32.mrb[0].mxu0
        %473 = vmatprep.mubr.bf16.mxu0 0
        %474 = vmatmul.mubr.bf16.gmra.mrb[0].mxu0 %v355
        %v475 = vpop.f32.mrb[0].mxu0
        %v476 = vadd.f32 0.0, %v475
        %v477 = vpop.f32.mrb[0].mxu0
        %v478 = vpop.f32.mrb[0].mxu0
        %v479 = vpop.f32.mrb[0].mxu0
        %480 = vdwg.mxu0
        %v482 = vunpack.c.l.b16 %v258
        %v483 = vpack.c.b16 %v482, %v482
        %v505 = vunpack.c.l.b16 %v259
        %v506 = vunpack.c.l.b16 %v260
        %v507 = vunpack.c.l.b16 %v261
        %v508 = vunpack.c.l.b16 %v262
        %v509 = vunpack.c.l.b16 %v263
        %v510 = vunpack.c.l.b16 %v264
        %v511 = vunpack.c.l.b16 %v265
        %v512 = vunpack.c.l.b16 %v266
        %v513 = vunpack.c.l.b16 %v267
        %v514 = vunpack.c.l.b16 %v268
        %v515 = vunpack.c.l.b16 %v269
        %v516 = vunpack.c.l.b16 %v270
        %v517 = vunpack.c.l.b16 %v271
        %v518 = vunpack.c.l.b16 %v272
        %v519 = vunpack.c.l.b16 %v273
        %v520 = vunpack.c.l.b16 %v274
        %v521 = vpack.c.b16 %v506, %v505
        %v522 = vpack.c.b16 %v508, %v507
        %v523 = vpack.c.b16 %v510, %v509
        %v524 = vpack.c.b16 %v512, %v511
        %v525 = vpack.c.b16 %v514, %v513
        %v526 = vpack.c.b16 %v516, %v515
        %v527 = vpack.c.b16 %v518, %v517
        %v528 = vpack.c.b16 %v520, %v519
        %537 = vmatprep.subr.bf16.mxu0 0
        %538 = vmatpush1.bf16.msra.mxu0 %v521
        %539 = vmatprep.subr.bf16.mxu0 0
        %540 = vmatpush1.bf16.msra.mxu0 %v522
        %541 = vmatprep.subr.bf16.mxu0 0
        %542 = vmatpush1.bf16.msra.mxu0 %v523
        %543 = vmatprep.subr.bf16.mxu0 0
        %544 = vmatpush1.bf16.msra.mxu0 %v524
        %545 = vmatprep.subr.bf16.mxu0 0
        %546 = vmatpush1.bf16.msra.mxu0 %v525
        %547 = vmatprep.subr.bf16.mxu0 0
        %548 = vmatpush1.bf16.msra.mxu0 %v526
        %549 = vmatprep.subr.bf16.mxu0 0
        %550 = vmatpush1.bf16.msra.mxu0 %v527
        %551 = vmatprep.subr.bf16.mxu0 0
        %552 = vmatpush1.bf16.msra.mxu0 %v528
        %553 = vmatprep.subr.bf16.mxu0 0
        %554 = vmatpush1.bf16.msra.mxu0 0
        %555 = vmatprep.subr.bf16.mxu0 0
        %556 = vmatpush1.bf16.msra.mxu0 0
        %557 = vmatprep.subr.bf16.mxu0 0
        %558 = vmatpush1.bf16.msra.mxu0 0
        %559 = vmatprep.subr.bf16.mxu0 0
        %560 = vmatpush1.bf16.msra.mxu0 0
        %561 = vmatprep.subr.bf16.mxu0 0
        %562 = vmatpush1.bf16.msra.mxu0 0
        %563 = vmatprep.subr.bf16.mxu0 0
        %564 = vmatpush1.bf16.msra.mxu0 0
        %565 = vmatprep.subr.bf16.mxu0 0
        %566 = vmatpush1.bf16.msra.mxu0 0
        %567 = vmatprep.subr.bf16.mxu0 0
        %568 = vmatpush1.bf16.msra.mxu0 0
        %569 = vmatprep.mubr.bf16.mxu0 0
        %570 = vmatmul.mubr.bf16.gmra.mrb[0].mxu0 %v311
        %v571 = vpop.f32.mrb[0].mxu0
        %v572 = vadd.f32 %v444, %v571
        %v573 = vpop.f32.mrb[0].mxu0
        %v574 = vpop.f32.mrb[0].mxu0
        %v575 = vadd.f32 %v447, %v574
        %v576 = vpop.f32.mrb[0].mxu0
        %577 = vmatprep.mubr.bf16.mxu0 0
        %578 = vmatmul.mubr.bf16.gmra.mrb[0].mxu0 %v312
        %v579 = vpop.f32.mrb[0].mxu0
        %v580 = vadd.f32 %v452, %v579
        %v581 = vpop.f32.mrb[0].mxu0
        %v582 = vpop.f32.mrb[0].mxu0
        %v583 = vadd.f32 %v455, %v582
        %v584 = vpop.f32.mrb[0].mxu0
        %585 = vmatprep.mubr.bf16.mxu0 0
        %586 = vmatmul.mubr.bf16.gmra.mrb[0].mxu0 %v313
        %v587 = vpop.f32.mrb[0].mxu0
        %v588 = vadd.f32 %v460, %v587
        %v589 = vpop.f32.mrb[0].mxu0
        %v590 = vpop.f32.mrb[0].mxu0
        %v591 = vadd.f32 %v463, %v590
        %v592 = vpop.f32.mrb[0].mxu0
        %593 = vmatprep.mubr.bf16.mxu0 0
        %594 = vmatmul.mubr.bf16.gmra.mrb[0].mxu0 %v314
        %v595 = vpop.f32.mrb[0].mxu0
        %v596 = vadd.f32 %v468, %v595
        %v597 = vpop.f32.mrb[0].mxu0
        %v598 = vpop.f32.mrb[0].mxu0
        %v599 = vadd.f32 %v471, %v598
        %v600 = vpop.f32.mrb[0].mxu0
        %601 = vmatprep.mubr.bf16.mxu0 0
        %602 = vmatmul.mubr.bf16.gmra.mrb[0].mxu0 %v483
        %v603 = vpop.f32.mrb[0].mxu0
        %v604 = vadd.f32 %v476, %v603
        %v605 = vpop.f32.mrb[0].mxu0
        %v606 = vpop.f32.mrb[0].mxu0
        %v607 = vpop.f32.mrb[0].mxu0
        %608 = vdwg.mxu0
        %v609 = vld [vmem:[%s212] sm:$0xe]
        %s610 = scalar_lea.vmem [#allocation6], 128
        %v611 = vld [vmem:[%s610] sm:$0xf]
        %v612 = vld [vmem:[%s610 + $0x4] sm:$0xf]
        %v613 = vld [vmem:[%s610 + $0x8] sm:$0xf]
        %v614 = vld [vmem:[%s610 + $0xc] sm:$0xf]
        %v615 = vld [vmem:[%s610 + $0x10] sm:$0xf]
        %v616 = vld [vmem:[%s610 + $0x14] sm:$0xf]
        %v617 = vld [vmem:[%s610 + $0x18] sm:$0xf]
        %v618 = vld [vmem:[%s610 + $0x1c] sm:$0xf]
        %v619 = vld [vmem:[%s610 + $0x20] sm:$0xf]
        %v620 = vld [vmem:[%s610 + $0x24] sm:$0xf]
        %v621 = vld [vmem:[%s610 + $0x28] sm:$0xf]
        %v622 = vld [vmem:[%s610 + $0x2c] sm:$0xf]
        %v623 = vld [vmem:[%s610 + $0x30] sm:$0xf]
        %v624 = vld [vmem:[%s610 + $0x34] sm:$0xf]
        %v625 = vld [vmem:[%s610 + $0x38] sm:$0xf]
        %v626 = vld [vmem:[%s610 + $0x3c] sm:$0xf]
        %v628 = vunpack.c.l.b16 %v609
        %v629 = vpack.c.b16 %v303, %v628
        %vm630 = vcmask 1046528
        %v631 = vrot.slane %v629, 1
        %v632 = vrot.slane %v312, 1
        %v633 = vsel %vm630, %v631, %v632
        %v634 = vrot.slane %v313, 1
        %v635 = vsel %vm630, %v632, %v634
        %v636 = vrot.slane %v314, 1
        %v637 = vsel %vm630, %v634, %v636
        %v638 = vrot.slane %v315, 1
        %v639 = vsel %vm630, %v636, %v638
        %v661 = vunpack.c.l.b16 %v611
        %v662 = vunpack.c.l.b16 %v612
        %v663 = vunpack.c.l.b16 %v613
        %v664 = vunpack.c.l.b16 %v614
        %v665 = vunpack.c.l.b16 %v615
        %v666 = vunpack.c.l.b16 %v616
        %v667 = vunpack.c.l.b16 %v617
        %v668 = vunpack.c.l.b16 %v618
        %v669 = vunpack.c.l.b16 %v619
        %v670 = vunpack.c.l.b16 %v620
        %v671 = vunpack.c.l.b16 %v621
        %v672 = vunpack.c.l.b16 %v622
        %v673 = vunpack.c.l.b16 %v623
        %v674 = vunpack.c.l.b16 %v624
        %v675 = vunpack.c.l.b16 %v625
        %v676 = vunpack.c.l.b16 %v626
        %v677 = vpack.c.b16 %v662, %v661
        %v678 = vpack.c.b16 %v664, %v663
        %v679 = vpack.c.b16 %v666, %v665
        %v680 = vpack.c.b16 %v668, %v667
        %v681 = vpack.c.b16 %v670, %v669
        %v682 = vpack.c.b16 %v672, %v671
        %v683 = vpack.c.b16 %v674, %v673
        %v684 = vpack.c.b16 %v676, %v675
        %693 = vmatprep.subr.bf16.mxu0 0
        %694 = vmatpush1.bf16.msra.mxu0 %v677
        %695 = vmatprep.subr.bf16.mxu0 0
        %696 = vmatpush1.bf16.msra.mxu0 %v678
        %697 = vmatprep.subr.bf16.mxu0 0
        %698 = vmatpush1.bf16.msra.mxu0 %v679
        %699 = vmatprep.subr.bf16.mxu0 0
        %700 = vmatpush1.bf16.msra.mxu0 %v680
        %701 = vmatprep.subr.bf16.mxu0 0
        %702 = vmatpush1.bf16.msra.mxu0 %v681
        %703 = vmatprep.subr.bf16.mxu0 0
        %704 = vmatpush1.bf16.msra.mxu0 %v682
        %705 = vmatprep.subr.bf16.mxu0 0
        %706 = vmatpush1.bf16.msra.mxu0 %v683
        %707 = vmatprep.subr.bf16.mxu0 0
        %708 = vmatpush1.bf16.msra.mxu0 %v684
        %709 = vmatprep.subr.bf16.mxu0 0
        %710 = vmatpush1.bf16.msra.mxu0 0
        %711 = vmatprep.subr.bf16.mxu0 0
        %712 = vmatpush1.bf16.msra.mxu0 0
        %713 = vmatprep.subr.bf16.mxu0 0
        %714 = vmatpush1.bf16.msra.mxu0 0
        %715 = vmatprep.subr.bf16.mxu0 0
        %716 = vmatpush1.bf16.msra.mxu0 0
        %717 = vmatprep.subr.bf16.mxu0 0
        %718 = vmatpush1.bf16.msra.mxu0 0
        %719 = vmatprep.subr.bf16.mxu0 0
        %720 = vmatpush1.bf16.msra.mxu0 0
        %721 = vmatprep.subr.bf16.mxu0 0
        %722 = vmatpush1.bf16.msra.mxu0 0
        %723 = vmatprep.subr.bf16.mxu0 0
        %724 = vmatpush1.bf16.msra.mxu0 0
        %725 = vmatprep.mubr.bf16.mxu0 0
        %726 = vmatmul.mubr.bf16.gmra.mrb[0].mxu0 %v633
        %v727 = vpop.f32.mrb[0].mxu0
        %v728 = vadd.f32 0.0, %v727
        %v729 = vpop.f32.mrb[0].mxu0
        %v730 = vpop.f32.mrb[0].mxu0
        %v731 = vadd.f32 0.0, %v730
        %v732 = vpop.f32.mrb[0].mxu0
        %733 = vmatprep.mubr.bf16.mxu0 0
        %734 = vmatmul.mubr.bf16.gmra.mrb[0].mxu0 %v635
        %v735 = vpop.f32.mrb[0].mxu0
        %v736 = vadd.f32 0.0, %v735
        %v737 = vpop.f32.mrb[0].mxu0
        %v738 = vpop.f32.mrb[0].mxu0
        %v739 = vadd.f32 0.0, %v738
        %v740 = vpop.f32.mrb[0].mxu0
        %741 = vmatprep.mubr.bf16.mxu0 0
        %742 = vmatmul.mubr.bf16.gmra.mrb[0].mxu0 %v637
        %v743 = vpop.f32.mrb[0].mxu0
        %v744 = vadd.f32 0.0, %v743
        %v745 = vpop.f32.mrb[0].mxu0
        %v746 = vpop.f32.mrb[0].mxu0
        %v747 = vadd.f32 0.0, %v746
        %v748 = vpop.f32.mrb[0].mxu0
        %749 = vmatprep.mubr.bf16.mxu0 0
        %750 = vmatmul.mubr.bf16.gmra.mrb[0].mxu0 %v639
        %v751 = vpop.f32.mrb[0].mxu0
        %v752 = vadd.f32 0.0, %v751
        %v753 = vpop.f32.mrb[0].mxu0
        %v754 = vpop.f32.mrb[0].mxu0
        %v755 = vadd.f32 0.0, %v754
        %v756 = vpop.f32.mrb[0].mxu0
        %757 = vmatprep.mubr.bf16.mxu0 0
        %758 = vmatmul.mubr.bf16.gmra.mrb[0].mxu0 %v638
        %v759 = vpop.f32.mrb[0].mxu0
        %v760 = vadd.f32 0.0, %v759
        %v761 = vpop.f32.mrb[0].mxu0
        %v762 = vpop.f32.mrb[0].mxu0
        %v763 = vpop.f32.mrb[0].mxu0
        %764 = vdwg.mxu0
        %v765 = vadd.f32 %v572, %v728
        %v766 = vadd.f32 %v575, %v731
        %v767 = vadd.f32 %v580, %v736
        %v768 = vadd.f32 %v583, %v739
        %v769 = vadd.f32 %v588, %v744
        %v770 = vadd.f32 %v591, %v747
        %v771 = vadd.f32 %v596, %v752
        %v772 = vadd.f32 %v599, %v755
        %v773 = vadd.f32 %v604, %v760
        %v774 = vlaneseq
        %v775 = vshrl.u32 %v774, 7
        %v776 = vsub.s32 0, %v775
        %v777 = vrot.slane %v248, %v776
        %v778 = vadd.f32 %v765, %v777
        %v779 = vadd.f32 %v766, %v777
        %v780 = vadd.f32 %v767, %v777
        %v781 = vadd.f32 %v768, %v777
        %v782 = vadd.f32 %v769, %v777
        %v783 = vadd.f32 %v770, %v777
        %v784 = vadd.f32 %v771, %v777
        %v785 = vadd.f32 %v772, %v777
        %v786 = vadd.f32 %v773, %v777
        %v787 = vmax.f32 %v778, 0.0
        %v788 = vmax.f32 %v779, 0.0
        %v789 = vmax.f32 %v780, 0.0
        %v790 = vmax.f32 %v781, 0.0
        %v791 = vmax.f32 %v782, 0.0
        %v792 = vmax.f32 %v783, 0.0
        %v793 = vmax.f32 %v784, 0.0
        %v794 = vmax.f32 %v785, 0.0
        %v795 = vmax.f32 %v786, 0.0
        %v796 = vpack.c.bf16 %v788, %v787
        %v797 = vpack.c.bf16 %v790, %v789
        %v798 = vpack.c.bf16 %v792, %v791
        %v799 = vpack.c.bf16 %v794, %v793
        %v800 = vpack.c.bf16 %v795, %v795
        %v806 = vunpack.c.l.b16 %v796
        %v807 = vunpack.c.h.b16 %v796
        %v808 = vunpack.c.l.b16 %v797
        %v809 = vunpack.c.h.b16 %v797
        %v810 = vunpack.c.l.b16 %v798
        %v811 = vunpack.c.h.b16 %v798
        %v812 = vunpack.c.l.b16 %v799
        %v813 = vunpack.c.h.b16 %v799
        %v814 = vunpack.c.l.b16 %v800
        %v815 = vpack.c.b16 %v806, %v806
        %v816 = vpack.c.b16 %v807, %v807
        %v817 = vpack.c.b16 %v808, %v808
        %v818 = vpack.c.b16 %v809, %v809
        %v819 = vpack.c.b16 %v810, %v810
        %v820 = vpack.c.b16 %v811, %v811
        %v821 = vpack.c.b16 %v812, %v812
        %v822 = vpack.c.b16 %v813, %v813
        %v823 = vpack.c.b16 %v814, %v814
        %vm824 = vsmask.f32 256
        %vm825 = vsmask.f32 4368
        %vm826 = vmor %vm824, %vm825
        %v828 = vshrl.u32 %v815, 16
        %v830 = vrot.slane %v828, 7
        %v831 = vshll.u32 %v815, 16
        %v833 = vor.u32 %v830, %v831
        %v834 = vrot.slane %v830, 4
        %v836 = vshrl.u32 %v816, 16
        %v838 = vrot.slane %v836, 7
        %v839 = vshll.u32 %v816, 16
        %v841 = vor.u32 %v838, %v839
        %v842 = vsel %vm826, %v834, %v841
        %v843 = vrot.slane %v838, 4
        %v845 = vshrl.u32 %v817, 16
        %v847 = vrot.slane %v845, 7
        %v848 = vshll.u32 %v817, 16
        %v850 = vor.u32 %v847, %v848
        %v851 = vsel %vm826, %v843, %v850
        %v852 = vrot.slane %v847, 4
        %v854 = vshrl.u32 %v818, 16
        %v856 = vrot.slane %v854, 7
        %v857 = vshll.u32 %v818, 16
        %v859 = vor.u32 %v856, %v857
        %v860 = vsel %vm826, %v852, %v859
        %v861 = vrot.slane %v856, 4
        %v863 = vshrl.u32 %v819, 16
        %v865 = vrot.slane %v863, 7
        %v866 = vshll.u32 %v819, 16
        %v868 = vor.u32 %v865, %v866
        %v869 = vsel %vm826, %v861, %v868
        %v870 = vrot.slane %v865, 4
        %v872 = vshrl.u32 %v820, 16
        %v874 = vrot.slane %v872, 7
        %v875 = vshll.u32 %v820, 16
        %v877 = vor.u32 %v874, %v875
        %v878 = vsel %vm826, %v870, %v877
        %v879 = vrot.slane %v874, 4
        %v881 = vshrl.u32 %v821, 16
        %v883 = vrot.slane %v881, 7
        %v884 = vshll.u32 %v821, 16
        %v886 = vor.u32 %v883, %v884
        %v887 = vsel %vm826, %v879, %v886
        %v888 = vrot.slane %v883, 4
        %v890 = vshrl.u32 %v822, 16
        %v892 = vrot.slane %v890, 7
        %v893 = vshll.u32 %v822, 16
        %v895 = vor.u32 %v892, %v893
        %v896 = vsel %vm826, %v888, %v895
        %v897 = vrot.slane %v892, 4
        %v899 = vshrl.u32 %v823, 16
        %v901 = vrot.slane %v899, 7
        %v902 = vshll.u32 %v823, 16
        %v904 = vor.u32 %v901, %v902
        %v905 = vsel %vm826, %v897, %v904
        %vm915 = vcmask 1043456
        %vm916 = vsmask.f32 7938
        %vm917 = vmand %vm915, %vm916
        %v918 = vld [vmem:[#allocation2] sm:$0xf]
        %v919 = vsel %vm917, %v833, %v918
        %920 = vst [vmem:[#allocation2] sm:$0xf] %v919
        %921 = vst [vmem:[#allocation2 + $0x4] sm:$0xf] %v842
        %922 = vst [vmem:[#allocation2 + $0x8] sm:$0xf] %v851
        %923 = vst [vmem:[#allocation2 + $0xc] sm:$0xf] %v860
        %924 = vst [vmem:[#allocation2 + $0x10] sm:$0xf] %v869
        %925 = vst [vmem:[#allocation2 + $0x14] sm:$0xf] %v878
        %926 = vst [vmem:[#allocation2 + $0x18] sm:$0xf] %v887
        %927 = vst [vmem:[#allocation2 + $0x1c] sm:$0xf] %v896
        %vm928 = vsmask.f32 3328
        %vm929 = vmand %vm915, %vm928
        %v930 = vld [vmem:[#allocation2 + $0x20] sm:$0xf]
        %v931 = vsel %vm929, %v905, %v930
        %932 = vst [vmem:[#allocation2 + $0x20] sm:$0xf] %v931
        %vm933 = vcmask 1040384
        %vm934 = vmand %vm933, %vm824
        %v935 = vld [vmem:[#allocation2] sm:$0x1]
        %v936 = vsel %vm934, 0, %v935
        %937 = vst [vmem:[#allocation2] sm:$0x1] %v936
        %vm938 = vmand %vm933, %vm916
        %v939 = vld [vmem:[#allocation2 + $0x8] sm:$0x1]
        %v940 = vsel %vm938, 0, %v939
        %941 = vst [vmem:[#allocation2 + $0x8] sm:$0x1] %v940
        %vm942 = vcmask 1041409
        %vm943 = vsmask.f32 1280
        %vm944 = vmand %vm942, %vm943
        %v945 = vld [vmem:[#allocation2 + $0x8] sm:$0x2]
        %v946 = vsel %vm944, 0, %v945
        %947 = vst [vmem:[#allocation2 + $0x8] sm:$0x2] %v946
        %vm948 = vsmask.f32 7942
        %vm949 = vmand %vm942, %vm948
        %v950 = vld [vmem:[#allocation2 + $0x10] sm:$0x2]
        %v951 = vsel %vm949, 0, %v950
        %952 = vst [vmem:[#allocation2 + $0x10] sm:$0x2] %v951
        %vm953 = vcmask 1042434
        %vm954 = vsmask.f32 2304
        %vm955 = vmand %vm953, %vm954
        %v956 = vld [vmem:[#allocation2 + $0x10] sm:$0x4]
        %v957 = vsel %vm955, 0, %v956
        %958 = vst [vmem:[#allocation2 + $0x10] sm:$0x4] %v957
        %vm959 = vsmask.f32 7946
        %vm960 = vmand %vm953, %vm959
        %v961 = vld [vmem:[#allocation2 + $0x18] sm:$0x4]
        %v962 = vsel %vm960, 0, %v961
        %963 = vst [vmem:[#allocation2 + $0x18] sm:$0x4] %v962
        %vm964 = vcmask 1043459
        %vm965 = vmand %vm964, %vm928
        %v966 = vld [vmem:[#allocation2 + $0x18] sm:$0x8]
        %v967 = vsel %vm965, 0, %v966
        %968 = vst [vmem:[#allocation2 + $0x18] sm:$0x8] %v967
        %vm969 = vsmask.f32 7950
        %vm970 = vmand %vm964, %vm969
        %v971 = vld [vmem:[#allocation2 + $0x20] sm:$0x8]
        %v972 = vsel %vm970, 0, %v971
        %973 = vst [vmem:[#allocation2 + $0x20] sm:$0x8] %v972
        %v974 = vld [vmem:[#allocation2] sm:$0xf]
        %v975 = vld [vmem:[#allocation2 + $0x4] sm:$0xf]
        %v976 = vld [vmem:[#allocation2 + $0x8] sm:$0xf]
        %v977 = vld [vmem:[#allocation2 + $0xc] sm:$0xf]
        %v978 = vld [vmem:[#allocation2 + $0x10] sm:$0xf]
        %v979 = vld [vmem:[#allocation2 + $0x14] sm:$0xf]
        %v980 = vld [vmem:[#allocation2 + $0x18] sm:$0xf]
        %v981 = vld [vmem:[#allocation2 + $0x1c] sm:$0xf]
        %v982 = vld [vmem:[#allocation2 + $0x20] sm:$0x7]
        %v983 = vld [vmem:[#allocation8] sm:$0xf]
        %v984 = vld [vmem:[#allocation8 + $0x4] sm:$0xf]
        %v985 = vld [vmem:[#allocation8 + $0x8] sm:$0xf]
        %v986 = vld [vmem:[#allocation8 + $0xc] sm:$0xf]
        %v987 = vld [vmem:[#allocation8 + $0x10] sm:$0xf]
        %v988 = vld [vmem:[#allocation8 + $0x14] sm:$0xf]
        %v989 = vld [vmem:[#allocation8 + $0x18] sm:$0xf]
        %v990 = vld [vmem:[#allocation8 + $0x1c] sm:$0xf]
        %v991 = vld [vmem:[#allocation8 + $0x20] sm:$0xf]
        %v992 = vld [vmem:[#allocation8 + $0x24] sm:$0xf]
        %v993 = vld [vmem:[#allocation8 + $0x28] sm:$0xf]
        %v994 = vld [vmem:[#allocation8 + $0x2c] sm:$0xf]
        %v995 = vld [vmem:[#allocation8 + $0x30] sm:$0xf]
        %v996 = vld [vmem:[#allocation8 + $0x34] sm:$0xf]
        %v997 = vld [vmem:[#allocation8 + $0x38] sm:$0xf]
        %v998 = vld [vmem:[#allocation8 + $0x3c] sm:$0xf]
        %v999 = vld [vmem:[#allocation2 + $0x20] sm:$0xf]
        %s1000 = scalar_lea.vmem [#allocation8], 64
        %v1001 = vld [vmem:[%s1000] sm:$0xf]
        %v1002 = vld [vmem:[%s1000 + $0x4] sm:$0xf]
        %v1003 = vld [vmem:[%s1000 + $0x8] sm:$0xf]
        %v1004 = vld [vmem:[%s1000 + $0xc] sm:$0xf]
        %v1005 = vld [vmem:[%s1000 + $0x10] sm:$0xf]
        %v1006 = vld [vmem:[%s1000 + $0x14] sm:$0xf]
        %v1007 = vld [vmem:[%s1000 + $0x18] sm:$0xf]
        %v1008 = vld [vmem:[%s1000 + $0x1c] sm:$0xf]
        %v1009 = vld [vmem:[%s1000 + $0x20] sm:$0xf]
        %v1010 = vld [vmem:[%s1000 + $0x24] sm:$0xf]
        %v1011 = vld [vmem:[%s1000 + $0x28] sm:$0xf]
        %v1012 = vld [vmem:[%s1000 + $0x2c] sm:$0xf]
        %v1013 = vld [vmem:[%s1000 + $0x30] sm:$0xf]
        %v1014 = vld [vmem:[%s1000 + $0x34] sm:$0xf]
        %v1015 = vld [vmem:[%s1000 + $0x38] sm:$0xf]
        %v1016 = vld [vmem:[%s1000 + $0x3c] sm:$0xf]
        %v1026 = vunpack.c.l.b16 %v974
        %v1027 = vunpack.c.l.b16 %v975
        %v1028 = vunpack.c.l.b16 %v976
        %v1029 = vunpack.c.l.b16 %v977
        %v1030 = vunpack.c.l.b16 %v978
        %v1031 = vunpack.c.l.b16 %v979
        %v1032 = vunpack.c.l.b16 %v980
        %v1033 = vunpack.c.l.b16 %v981
        %v1034 = vunpack.c.l.b16 %v999
        %v1035 = vpack.c.b16 %v1027, %v1026
        %v1036 = vpack.c.b16 %v1029, %v1028
        %v1037 = vpack.c.b16 %v1031, %v1030
        %v1038 = vpack.c.b16 %v1033, %v1032
        %v1039 = vpack.c.b16 %v1034, %v1034
        %v1041 = vshrl.u32 %v1035, 16
        %v1043 = vshll.u32 %v1035, 16
        %v1045 = vrot.slane %v1043, 1
        %v1046 = vor.u32 %v1041, %v1045
        %v1048 = vshll.u32 %v1036, 16
        %v1050 = vrot.slane %v1048, 1
        %v1051 = vsel %vm316, %v1046, %v1050
        %v1052 = vshrl.u32 %v1036, 16
        %v1054 = vor.u32 %v1052, %v1050
        %v1056 = vshll.u32 %v1037, 16
        %v1058 = vrot.slane %v1056, 1
        %v1059 = vsel %vm316, %v1054, %v1058
        %v1060 = vshrl.u32 %v1037, 16
        %v1062 = vor.u32 %v1060, %v1058
        %v1064 = vshll.u32 %v1038, 16
        %v1066 = vrot.slane %v1064, 1
        %v1067 = vsel %vm316, %v1062, %v1066
        %v1068 = vshrl.u32 %v1038, 16
        %v1070 = vor.u32 %v1068, %v1066
        %v1072 = vshll.u32 %v1039, 16
        %v1074 = vrot.slane %v1072, 1
        %v1075 = vsel %vm316, %v1070, %v1074
        %v1076 = vshrl.u32 %v1039, 16
        %v1078 = vor.u32 %v1076, %v1074
        %v1100 = vunpack.c.l.b16 %v1001
        %v1101 = vunpack.c.l.b16 %v1002
        %v1102 = vunpack.c.l.b16 %v1003
        %v1103 = vunpack.c.l.b16 %v1004
        %v1104 = vunpack.c.l.b16 %v1005
        %v1105 = vunpack.c.l.b16 %v1006
        %v1106 = vunpack.c.l.b16 %v1007
        %v1107 = vunpack.c.l.b16 %v1008
        %v1108 = vunpack.c.l.b16 %v1009
        %v1109 = vunpack.c.l.b16 %v1010
        %v1110 = vunpack.c.l.b16 %v1011
        %v1111 = vunpack.c.l.b16 %v1012
        %v1112 = vunpack.c.l.b16 %v1013
        %v1113 = vunpack.c.l.b16 %v1014
        %v1114 = vunpack.c.l.b16 %v1015
        %v1115 = vunpack.c.l.b16 %v1016
        %v1116 = vpack.c.b16 %v1101, %v1100
        %v1117 = vpack.c.b16 %v1103, %v1102
        %v1118 = vpack.c.b16 %v1105, %v1104
        %v1119 = vpack.c.b16 %v1107, %v1106
        %v1120 = vpack.c.b16 %v1109, %v1108
        %v1121 = vpack.c.b16 %v1111, %v1110
        %v1122 = vpack.c.b16 %v1113, %v1112
        %v1123 = vpack.c.b16 %v1115, %v1114
        %1132 = vmatprep.subr.bf16.mxu0 0
        %1133 = vmatpush1.bf16.msra.mxu0 %v1116
        %1134 = vmatprep.subr.bf16.mxu0 0
        %1135 = vmatpush1.bf16.msra.mxu0 %v1117
        %1136 = vmatprep.subr.bf16.mxu0 0
        %1137 = vmatpush1.bf16.msra.mxu0 %v1118
        %1138 = vmatprep.subr.bf16.mxu0 0
        %1139 = vmatpush1.bf16.msra.mxu0 %v1119
        %1140 = vmatprep.subr.bf16.mxu0 0
        %1141 = vmatpush1.bf16.msra.mxu0 %v1120
        %1142 = vmatprep.subr.bf16.mxu0 0
        %1143 = vmatpush1.bf16.msra.mxu0 %v1121
        %1144 = vmatprep.subr.bf16.mxu0 0
        %1145 = vmatpush1.bf16.msra.mxu0 %v1122
        %1146 = vmatprep.subr.bf16.mxu0 0
        %1147 = vmatpush1.bf16.msra.mxu0 %v1123
        %1148 = vmatprep.subr.bf16.mxu0 0
        %1149 = vmatpush1.bf16.msra.mxu0 0
        %1150 = vmatprep.subr.bf16.mxu0 0
        %1151 = vmatpush1.bf16.msra.mxu0 0
        %1152 = vmatprep.subr.bf16.mxu0 0
        %1153 = vmatpush1.bf16.msra.mxu0 0
        %1154 = vmatprep.subr.bf16.mxu0 0
        %1155 = vmatpush1.bf16.msra.mxu0 0
        %1156 = vmatprep.subr.bf16.mxu0 0
        %1157 = vmatpush1.bf16.msra.mxu0 0
        %1158 = vmatprep.subr.bf16.mxu0 0
        %1159 = vmatpush1.bf16.msra.mxu0 0
        %1160 = vmatprep.subr.bf16.mxu0 0
        %1161 = vmatpush1.bf16.msra.mxu0 0
        %1162 = vmatprep.subr.bf16.mxu0 0
        %1163 = vmatpush1.bf16.msra.mxu0 0
        %1164 = vmatprep.mubr.bf16.mxu0 0
        %1165 = vmatmul.mubr.bf16.gmra.mrb[0].mxu0 %v1051
        %v1166 = vpop.f32.mrb[0].mxu0
        %v1167 = vadd.f32 0.0, %v1166
        %v1168 = vpop.f32.mrb[0].mxu0
        %v1169 = vpop.f32.mrb[0].mxu0
        %v1170 = vadd.f32 0.0, %v1169
        %v1171 = vpop.f32.mrb[0].mxu0
        %1172 = vmatprep.mubr.bf16.mxu0 0
        %1173 = vmatmul.mubr.bf16.gmra.mrb[0].mxu0 %v1059
        %v1174 = vpop.f32.mrb[0].mxu0
        %v1175 = vadd.f32 0.0, %v1174
        %v1176 = vpop.f32.mrb[0].mxu0
        %v1177 = vpop.f32.mrb[0].mxu0
        %v1178 = vadd.f32 0.0, %v1177
        %v1179 = vpop.f32.mrb[0].mxu0
        %1180 = vmatprep.mubr.bf16.mxu0 0
        %1181 = vmatmul.mubr.bf16.gmra.mrb[0].mxu0 %v1067
        %v1182 = vpop.f32.mrb[0].mxu0
        %v1183 = vadd.f32 0.0, %v1182
        %v1184 = vpop.f32.mrb[0].mxu0
        %v1185 = vpop.f32.mrb[0].mxu0
        %v1186 = vadd.f32 0.0, %v1185
        %v1187 = vpop.f32.mrb[0].mxu0
        %1188 = vmatprep.mubr.bf16.mxu0 0
        %1189 = vmatmul.mubr.bf16.gmra.mrb[0].mxu0 %v1075
        %v1190 = vpop.f32.mrb[0].mxu0
        %v1191 = vadd.f32 0.0, %v1190
        %v1192 = vpop.f32.mrb[0].mxu0
        %v1193 = vpop.f32.mrb[0].mxu0
        %v1194 = vadd.f32 0.0, %v1193
        %v1195 = vpop.f32.mrb[0].mxu0
        %1196 = vmatprep.mubr.bf16.mxu0 0
        %1197 = vmatmul.mubr.bf16.gmra.mrb[0].mxu0 %v1078
        %v1198 = vpop.f32.mrb[0].mxu0
        %v1199 = vadd.f32 0.0, %v1198
        %v1200 = vpop.f32.mrb[0].mxu0
        %v1201 = vpop.f32.mrb[0].mxu0
        %v1202 = vpop.f32.mrb[0].mxu0
        %1203 = vdwg.mxu0
        %v1205 = vunpack.c.l.b16 %v982
        %v1206 = vpack.c.b16 %v1205, %v1205
        %v1228 = vunpack.c.l.b16 %v983
        %v1229 = vunpack.c.l.b16 %v984
        %v1230 = vunpack.c.l.b16 %v985
        %v1231 = vunpack.c.l.b16 %v986
        %v1232 = vunpack.c.l.b16 %v987
        %v1233 = vunpack.c.l.b16 %v988
        %v1234 = vunpack.c.l.b16 %v989
        %v1235 = vunpack.c.l.b16 %v990
        %v1236 = vunpack.c.l.b16 %v991
        %v1237 = vunpack.c.l.b16 %v992
        %v1238 = vunpack.c.l.b16 %v993
        %v1239 = vunpack.c.l.b16 %v994
        %v1240 = vunpack.c.l.b16 %v995
        %v1241 = vunpack.c.l.b16 %v996
        %v1242 = vunpack.c.l.b16 %v997
        %v1243 = vunpack.c.l.b16 %v998
        %v1244 = vpack.c.b16 %v1229, %v1228
        %v1245 = vpack.c.b16 %v1231, %v1230
        %v1246 = vpack.c.b16 %v1233, %v1232
        %v1247 = vpack.c.b16 %v1235, %v1234
        %v1248 = vpack.c.b16 %v1237, %v1236
        %v1249 = vpack.c.b16 %v1239, %v1238
        %v1250 = vpack.c.b16 %v1241, %v1240
        %v1251 = vpack.c.b16 %v1243, %v1242
        %1260 = vmatprep.subr.bf16.mxu0 0
        %1261 = vmatpush1.bf16.msra.mxu0 %v1244
        %1262 = vmatprep.subr.bf16.mxu0 0
        %1263 = vmatpush1.bf16.msra.mxu0 %v1245
        %1264 = vmatprep.subr.bf16.mxu0 0
        %1265 = vmatpush1.bf16.msra.mxu0 %v1246
        %1266 = vmatprep.subr.bf16.mxu0 0
        %1267 = vmatpush1.bf16.msra.mxu0 %v1247
        %1268 = vmatprep.subr.bf16.mxu0 0
        %1269 = vmatpush1.bf16.msra.mxu0 %v1248
        %1270 = vmatprep.subr.bf16.mxu0 0
        %1271 = vmatpush1.bf16.msra.mxu0 %v1249
        %1272 = vmatprep.subr.bf16.mxu0 0
        %1273 = vmatpush1.bf16.msra.mxu0 %v1250
        %1274 = vmatprep.subr.bf16.mxu0 0
        %1275 = vmatpush1.bf16.msra.mxu0 %v1251
        %1276 = vmatprep.subr.bf16.mxu0 0
        %1277 = vmatpush1.bf16.msra.mxu0 0
        %1278 = vmatprep.subr.bf16.mxu0 0
        %1279 = vmatpush1.bf16.msra.mxu0 0
        %1280 = vmatprep.subr.bf16.mxu0 0
        %1281 = vmatpush1.bf16.msra.mxu0 0
        %1282 = vmatprep.subr.bf16.mxu0 0
        %1283 = vmatpush1.bf16.msra.mxu0 0
        %1284 = vmatprep.subr.bf16.mxu0 0
        %1285 = vmatpush1.bf16.msra.mxu0 0
        %1286 = vmatprep.subr.bf16.mxu0 0
        %1287 = vmatpush1.bf16.msra.mxu0 0
        %1288 = vmatprep.subr.bf16.mxu0 0
        %1289 = vmatpush1.bf16.msra.mxu0 0
        %1290 = vmatprep.subr.bf16.mxu0 0
        %1291 = vmatpush1.bf16.msra.mxu0 0
        %1292 = vmatprep.mubr.bf16.mxu0 0
        %1293 = vmatmul.mubr.bf16.gmra.mrb[0].mxu0 %v1035
        %v1294 = vpop.f32.mrb[0].mxu0
        %v1295 = vadd.f32 %v1167, %v1294
        %v1296 = vpop.f32.mrb[0].mxu0
        %v1297 = vpop.f32.mrb[0].mxu0
        %v1298 = vadd.f32 %v1170, %v1297
        %v1299 = vpop.f32.mrb[0].mxu0
        %1300 = vmatprep.mubr.bf16.mxu0 0
        %1301 = vmatmul.mubr.bf16.gmra.mrb[0].mxu0 %v1036
        %v1302 = vpop.f32.mrb[0].mxu0
        %v1303 = vadd.f32 %v1175, %v1302
        %v1304 = vpop.f32.mrb[0].mxu0
        %v1305 = vpop.f32.mrb[0].mxu0
        %v1306 = vadd.f32 %v1178, %v1305
        %v1307 = vpop.f32.mrb[0].mxu0
        %1308 = vmatprep.mubr.bf16.mxu0 0
        %1309 = vmatmul.mubr.bf16.gmra.mrb[0].mxu0 %v1037
        %v1310 = vpop.f32.mrb[0].mxu0
        %v1311 = vadd.f32 %v1183, %v1310
        %v1312 = vpop.f32.mrb[0].mxu0
        %v1313 = vpop.f32.mrb[0].mxu0
        %v1314 = vadd.f32 %v1186, %v1313
        %v1315 = vpop.f32.mrb[0].mxu0
        %1316 = vmatprep.mubr.bf16.mxu0 0
        %1317 = vmatmul.mubr.bf16.gmra.mrb[0].mxu0 %v1038
        %v1318 = vpop.f32.mrb[0].mxu0
        %v1319 = vadd.f32 %v1191, %v1318
        %v1320 = vpop.f32.mrb[0].mxu0
        %v1321 = vpop.f32.mrb[0].mxu0
        %v1322 = vadd.f32 %v1194, %v1321
        %v1323 = vpop.f32.mrb[0].mxu0
        %1324 = vmatprep.mubr.bf16.mxu0 0
        %1325 = vmatmul.mubr.bf16.gmra.mrb[0].mxu0 %v1206
        %v1326 = vpop.f32.mrb[0].mxu0
        %v1327 = vadd.f32 %v1199, %v1326
        %v1328 = vpop.f32.mrb[0].mxu0
        %v1329 = vpop.f32.mrb[0].mxu0
        %v1330 = vpop.f32.mrb[0].mxu0
        %1331 = vdwg.mxu0
        %v1332 = vld [vmem:[#allocation2] sm:$0xe]
        %s1333 = scalar_lea.vmem [#allocation8], 128
        %v1334 = vld [vmem:[%s1333] sm:$0xf]
        %v1335 = vld [vmem:[%s1333 + $0x4] sm:$0xf]
        %v1336 = vld [vmem:[%s1333 + $0x8] sm:$0xf]
        %v1337 = vld [vmem:[%s1333 + $0xc] sm:$0xf]
        %v1338 = vld [vmem:[%s1333 + $0x10] sm:$0xf]
        %v1339 = vld [vmem:[%s1333 + $0x14] sm:$0xf]
        %v1340 = vld [vmem:[%s1333 + $0x18] sm:$0xf]
        %v1341 = vld [vmem:[%s1333 + $0x1c] sm:$0xf]
        %v1342 = vld [vmem:[%s1333 + $0x20] sm:$0xf]
        %v1343 = vld [vmem:[%s1333 + $0x24] sm:$0xf]
        %v1344 = vld [vmem:[%s1333 + $0x28] sm:$0xf]
        %v1345 = vld [vmem:[%s1333 + $0x2c] sm:$0xf]
        %v1346 = vld [vmem:[%s1333 + $0x30] sm:$0xf]
        %v1347 = vld [vmem:[%s1333 + $0x34] sm:$0xf]
        %v1348 = vld [vmem:[%s1333 + $0x38] sm:$0xf]
        %v1349 = vld [vmem:[%s1333 + $0x3c] sm:$0xf]
        %v1351 = vunpack.c.l.b16 %v1332
        %v1352 = vpack.c.b16 %v1027, %v1351
        %v1353 = vrot.slane %v1352, 1
        %v1354 = vrot.slane %v1036, 1
        %v1355 = vsel %vm630, %v1353, %v1354
        %v1356 = vrot.slane %v1037, 1
        %v1357 = vsel %vm630, %v1354, %v1356
        %v1358 = vrot.slane %v1038, 1
        %v1359 = vsel %vm630, %v1356, %v1358
        %v1360 = vrot.slane %v1039, 1
        %v1361 = vsel %vm630, %v1358, %v1360
        %v1383 = vunpack.c.l.b16 %v1334
        %v1384 = vunpack.c.l.b16 %v1335
        %v1385 = vunpack.c.l.b16 %v1336
        %v1386 = vunpack.c.l.b16 %v1337
        %v1387 = vunpack.c.l.b16 %v1338
        %v1388 = vunpack.c.l.b16 %v1339
        %v1389 = vunpack.c.l.b16 %v1340
        %v1390 = vunpack.c.l.b16 %v1341
        %v1391 = vunpack.c.l.b16 %v1342
        %v1392 = vunpack.c.l.b16 %v1343
        %v1393 = vunpack.c.l.b16 %v1344
        %v1394 = vunpack.c.l.b16 %v1345
        %v1395 = vunpack.c.l.b16 %v1346
        %v1396 = vunpack.c.l.b16 %v1347
        %v1397 = vunpack.c.l.b16 %v1348
        %v1398 = vunpack.c.l.b16 %v1349
        %v1399 = vpack.c.b16 %v1384, %v1383
        %v1400 = vpack.c.b16 %v1386, %v1385
        %v1401 = vpack.c.b16 %v1388, %v1387
        %v1402 = vpack.c.b16 %v1390, %v1389
        %v1403 = vpack.c.b16 %v1392, %v1391
        %v1404 = vpack.c.b16 %v1394, %v1393
        %v1405 = vpack.c.b16 %v1396, %v1395
        %v1406 = vpack.c.b16 %v1398, %v1397
        %1415 = vmatprep.subr.bf16.mxu0 0
        %1416 = vmatpush1.bf16.msra.mxu0 %v1399
        %1417 = vmatprep.subr.bf16.mxu0 0
        %1418 = vmatpush1.bf16.msra.mxu0 %v1400
        %1419 = vmatprep.subr.bf16.mxu0 0
        %1420 = vmatpush1.bf16.msra.mxu0 %v1401
        %1421 = vmatprep.subr.bf16.mxu0 0
        %1422 = vmatpush1.bf16.msra.mxu0 %v1402
        %1423 = vmatprep.subr.bf16.mxu0 0
        %1424 = vmatpush1.bf16.msra.mxu0 %v1403
        %1425 = vmatprep.subr.bf16.mxu0 0
        %1426 = vmatpush1.bf16.msra.mxu0 %v1404
        %1427 = vmatprep.subr.bf16.mxu0 0
        %1428 = vmatpush1.bf16.msra.mxu0 %v1405
        %1429 = vmatprep.subr.bf16.mxu0 0
        %1430 = vmatpush1.bf16.msra.mxu0 %v1406
        %1431 = vmatprep.subr.bf16.mxu0 0
        %1432 = vmatpush1.bf16.msra.mxu0 0
        %1433 = vmatprep.subr.bf16.mxu0 0
        %1434 = vmatpush1.bf16.msra.mxu0 0
        %1435 = vmatprep.subr.bf16.mxu0 0
        %1436 = vmatpush1.bf16.msra.mxu0 0
        %1437 = vmatprep.subr.bf16.mxu0 0
        %1438 = vmatpush1.bf16.msra.mxu0 0
        %1439 = vmatprep.subr.bf16.mxu0 0
        %1440 = vmatpush1.bf16.msra.mxu0 0
        %1441 = vmatprep.subr.bf16.mxu0 0
        %1442 = vmatpush1.bf16.msra.mxu0 0
        %1443 = vmatprep.subr.bf16.mxu0 0
        %1444 = vmatpush1.bf16.msra.mxu0 0
        %1445 = vmatprep.subr.bf16.mxu0 0
        %1446 = vmatpush1.bf16.msra.mxu0 0
        %1447 = vmatprep.mubr.bf16.mxu0 0
        %1448 = vmatmul.mubr.bf16.gmra.mrb[0].mxu0 %v1355
        %v1449 = vpop.f32.mrb[0].mxu0
        %v1450 = vadd.f32 0.0, %v1449
        %v1451 = vpop.f32.mrb[0].mxu0
        %v1452 = vpop.f32.mrb[0].mxu0
        %v1453 = vadd.f32 0.0, %v1452
        %v1454 = vpop.f32.mrb[0].mxu0
        %1455 = vmatprep.mubr.bf16.mxu0 0
        %1456 = vmatmul.mubr.bf16.gmra.mrb[0].mxu0 %v1357
        %v1457 = vpop.f32.mrb[0].mxu0
        %v1458 = vadd.f32 0.0, %v1457
        %v1459 = vpop.f32.mrb[0].mxu0
        %v1460 = vpop.f32.mrb[0].mxu0
        %v1461 = vadd.f32 0.0, %v1460
        %v1462 = vpop.f32.mrb[0].mxu0
        %1463 = vmatprep.mubr.bf16.mxu0 0
        %1464 = vmatmul.mubr.bf16.gmra.mrb[0].mxu0 %v1359
        %v1465 = vpop.f32.mrb[0].mxu0
        %v1466 = vadd.f32 0.0, %v1465
        %v1467 = vpop.f32.mrb[0].mxu0
        %v1468 = vpop.f32.mrb[0].mxu0
        %v1469 = vadd.f32 0.0, %v1468
        %v1470 = vpop.f32.mrb[0].mxu0
        %1471 = vmatprep.mubr.bf16.mxu0 0
        %1472 = vmatmul.mubr.bf16.gmra.mrb[0].mxu0 %v1361
        %v1473 = vpop.f32.mrb[0].mxu0
        %v1474 = vadd.f32 0.0, %v1473
        %v1475 = vpop.f32.mrb[0].mxu0
        %v1476 = vpop.f32.mrb[0].mxu0
        %v1477 = vadd.f32 0.0, %v1476
        %v1478 = vpop.f32.mrb[0].mxu0
        %1479 = vmatprep.mubr.bf16.mxu0 0
        %1480 = vmatmul.mubr.bf16.gmra.mrb[0].mxu0 %v1360
        %v1481 = vpop.f32.mrb[0].mxu0
        %v1482 = vadd.f32 0.0, %v1481
        %v1483 = vpop.f32.mrb[0].mxu0
        %v1484 = vpop.f32.mrb[0].mxu0
        %v1485 = vpop.f32.mrb[0].mxu0
        %1486 = vdwg.mxu0
        %v1487 = vadd.f32 %v1295, %v1450
        %v1488 = vadd.f32 %v1298, %v1453
        %v1489 = vadd.f32 %v1303, %v1458
        %v1490 = vadd.f32 %v1306, %v1461
        %v1491 = vadd.f32 %v1311, %v1466
        %v1492 = vadd.f32 %v1314, %v1469
        %v1493 = vadd.f32 %v1319, %v1474
        %v1494 = vadd.f32 %v1322, %v1477
        %v1495 = vadd.f32 %v1327, %v1482
        %v1496 = vld [vmem:[%s212] sm:$0xf]
        %v1497 = vld [vmem:[%s212 + $0x4] sm:$0xf]
        %v1498 = vld [vmem:[%s212 + $0x8] sm:$0xf]
        %v1499 = vld [vmem:[%s212 + $0xc] sm:$0xf]
        %v1500 = vld [vmem:[%s212 + $0x10] sm:$0xf]
        %v1501 = vld [vmem:[%s212 + $0x14] sm:$0xf]
        %v1502 = vld [vmem:[%s212 + $0x18] sm:$0xf]
        %v1503 = vld [vmem:[%s212 + $0x1c] sm:$0xf]
        %v1504 = vld [vmem:[%s212 + $0x20] sm:$0xf]
        %v1505 = vunpack.c.l.bf16 %v1496
        %v1506 = vunpack.c.l.bf16 %v1497
        %v1507 = vunpack.c.l.bf16 %v1498
        %v1508 = vunpack.c.l.bf16 %v1499
        %v1509 = vunpack.c.l.bf16 %v1500
        %v1510 = vunpack.c.l.bf16 %v1501
        %v1511 = vunpack.c.l.bf16 %v1502
        %v1512 = vunpack.c.l.bf16 %v1503
        %v1513 = vunpack.c.l.bf16 %v1504
        %v1514 = vlaneseq
        %v1515 = vshrl.u32 %v1514, 7
        %v1516 = vsub.s32 0, %v1515
        %v1517 = vrot.slane %v249, %v1516
        %v1518 = vadd.f32 %v1487, %v1517
        %v1519 = vadd.f32 %v1488, %v1517
        %v1520 = vadd.f32 %v1489, %v1517
        %v1521 = vadd.f32 %v1490, %v1517
        %v1522 = vadd.f32 %v1491, %v1517
        %v1523 = vadd.f32 %v1492, %v1517
        %v1524 = vadd.f32 %v1493, %v1517
        %v1525 = vadd.f32 %v1494, %v1517
        %v1526 = vadd.f32 %v1495, %v1517
        %vm1536 = vcmask 1046528
        %v1537 = vrot.slane %v1505, 1
        %v1538 = vrot.slane %v1506, 1
        %v1539 = vsel %vm1536, %v1537, %v1538
        %v1540 = vrot.slane %v1507, 1
        %v1541 = vsel %vm1536, %v1538, %v1540
        %v1542 = vrot.slane %v1508, 1
        %v1543 = vsel %vm1536, %v1540, %v1542
        %v1544 = vrot.slane %v1509, 1
        %v1545 = vsel %vm1536, %v1542, %v1544
        %v1546 = vrot.slane %v1510, 1
        %v1547 = vsel %vm1536, %v1544, %v1546
        %v1548 = vrot.slane %v1511, 1
        %v1549 = vsel %vm1536, %v1546, %v1548
        %v1550 = vrot.slane %v1512, 1
        %v1551 = vsel %vm1536, %v1548, %v1550
        %v1552 = vrot.slane %v1513, 1
        %v1553 = vsel %vm1536, %v1550, %v1552
        %v1563 = vadd.f32 %v1518, %v1539
        %v1564 = vadd.f32 %v1519, %v1541
        %v1565 = vadd.f32 %v1520, %v1543
        %v1566 = vadd.f32 %v1521, %v1545
        %v1567 = vadd.f32 %v1522, %v1547
        %v1568 = vadd.f32 %v1523, %v1549
        %v1569 = vadd.f32 %v1524, %v1551
        %v1570 = vadd.f32 %v1525, %v1553
        %v1571 = vadd.f32 %v1526, %v1552
        %v1572 = vmax.f32 %v1563, 0.0
        %v1573 = vmax.f32 %v1564, 0.0
        %v1574 = vmax.f32 %v1565, 0.0
        %v1575 = vmax.f32 %v1566, 0.0
        %v1576 = vmax.f32 %v1567, 0.0
        %v1577 = vmax.f32 %v1568, 0.0
        %v1578 = vmax.f32 %v1569, 0.0
        %v1579 = vmax.f32 %v1570, 0.0
        %v1580 = vmax.f32 %v1571, 0.0
        %1581 = vst [vmem:[%s244 + $0x1] sm:$0xff] %v1572
        %1582 = vst [vmem:[%s244 + $0x9] sm:$0xff] %v1573
        %1583 = vst [vmem:[%s244 + $0x11] sm:$0xff] %v1574
        %1584 = vst [vmem:[%s244 + $0x19] sm:$0xff] %v1575
        %1585 = vst [vmem:[%s244 + $0x21] sm:$0xff] %v1576
        %1586 = vst [vmem:[%s244 + $0x29] sm:$0xff] %v1577
        %1587 = vst [vmem:[%s244 + $0x31] sm:$0xff] %v1578
        %1588 = vst [vmem:[%s244 + $0x39] sm:$0xff] %v1579
        %1589 = vst [vmem:[%s244 + $0x41] sm:$0x3f] %v1580
        %s1590 = sand.u32 %s119, 1
        %s1591 = scalar_lea.sflag [#allocation5], %s1590
        %s1592 = sand.u32 %s119, 1
        %s1593 = smul.addr %s1592, 72
        %s1594 = scalar_lea.vmem [#allocation9], %s1593
        // Predicated region
        $region49: #{tpu_custom_call.1} parent=35 // pred_check
          %p1595 = pneg %p129
        $region50: #{tpu_custom_call.1} parent=35 // pred_check_branch
          %1597 = sbr.rel (%p1595) target = $region52
        $region51: #{tpu_custom_call.1} parent=35 // pred_region
          %s1598 = smul.u32 9, %s22
          %s1600 = ssub.s32 1152, 1152
          %1601 = vsyncadd %s1591, %s1600
          %s1602 = smul.addr %s1598, 128
          %s1603 = scalar_lea.hbm %s4, %s1602
          %s1604 = sshll.u32 %s1594, 4
          %s1605 = int_to_ptr.vmem [resolvable:$true] %s1604
          %1610 = dma.vmem_to_hbm [thread:$0]  %s1605, 1152, %s1603, %s1591, 128, 128, 8
        $region52: #{tpu_custom_call.1} parent=35 // pred_fallthru
          _
      $region36: #{tpu_custom_call.1} parent=5 // pred_fallthru
        _
      %p1611 = scmp.le.s32.totalorder 2, %s17
      // Predicated region
      $region53: #{tpu_custom_call.1} parent=5 // pred_check
        %p1612 = pneg %p1611
      $region54: #{tpu_custom_call.1} parent=5 // pred_check_branch
        %1614 = sbr.rel (%p1612) target = $region56
      $region55: #{tpu_custom_call.1} parent=5 // pred_region
        %s1615 = ssub.s32 %s17, 2
        // Predicated region
        $region57: #{tpu_custom_call.1} parent=55 // pred_check
          %p1616 = pneg %p135
        $region58: #{tpu_custom_call.1} parent=55 // pred_check_branch
          %1618 = sbr.rel (%p1616) target = $region60
        $region59: #{tpu_custom_call.1} parent=55 // pred_region
          %s1619 = sand.u32 %s120, 1
          %s1620 = scalar_lea.sflag [#allocation5], %s1619
          %s1621 = sand.u32 %s120, 1
          %s1622 = smul.addr %s1621, 72
          %s1623 = scalar_lea.vmem [#allocation9], %s1622
          %1624 = dma.done %s1620, 1152
        $region60: #{tpu_custom_call.1} parent=55 // pred_fallthru
          _
      $region56: #{tpu_custom_call.1} parent=5 // pred_fallthru
        _
    $region6: #{tpu_custom_call.1} parent=1 // loop_footer
      %s21 = sadd.s32 1, %s17
    $region7: #{tpu_custom_call.1} parent=1 // loop_footer_branch
      %16 = sbr.rel target = $region3
    $region8: #{tpu_custom_call.1} parent=1 // loop_exit
      _
    %1625 = vsyncpa [#allocation4], 1
    %s1626 = scalar_lea.sflag [#allocation4], 1
    %1627 = vsyncpa %s1626, 1
    %1628 = vsyncpa [#allocation7], 1
    %1629 = vsyncpa [#allocation5], 1
    %s1630 = scalar_lea.sflag [#allocation5], 1
    %1631 = vsyncpa %s1630, 1

</llo_original>
